<compile_context>
chip_gen: v5e
topology: v5e:2x2
jax: 0.10.0
libtpu: 0.0.40
codegen_flags: <defaults>
</compile_context>

<pallas_src>
import jax
import jax.numpy as jnp
import numpy as np
from jax.experimental import pallas as pl
from jax.experimental.pallas import tpu as pltpu

KH = KW = 3
CONV_PLANES = 32      # fe_out_planes of the synthetic trunk (2048/512 in a real ResNet)
FEAT_DIM = 128        # PoseNet feat_dim (2048 in the real model); kept lane-dense
P_PAD = 128           # conv output planes zero-padded to a full lane width
OUT_PAD = 128         # head output padded; first 6 columns are [xyz | wpqr]


def _pick_b_tile(B):
    # Prefer a multiple-of-8 tile (full (8,128) output vreg store per step) while
    # keeping >= 2 grid steps so v7x's 2 TensorCores can both be used.
    for bt in (8, 4, 2, 1):
        if B % bt == 0 and (B // bt) >= 2:
            return bt
    return B


def _im2col(x):
    """(N, T, C, H, W) f32 -> (B, HW, KH*KW*C) bf16 halo-padded im2col (tap-major)."""
    N, T, C, H, W = x.shape
    B = N * T
    xb = x.reshape(B, C, H, W).transpose(0, 2, 3, 1)               # x.view(-1,*s[2:]) in NHWC
    xp = jnp.pad(xb, ((0, 0), (1, 1), (1, 1), (0, 0)))             # 1-pixel halo, pad=1
    cols = [xp[:, dy:dy + H, dx:dx + W, :].reshape(B, H * W, C)
            for dy in range(KH) for dx in range(KW)]
    return jnp.concatenate(cols, axis=-1).astype(jnp.bfloat16)     # (B, HW, 9C)


def mapnet_fused_kernel(x_ref, wconv_ref, bconv_ref, wfc_ref, bfc_ref,
                        whead_ref, bhead_ref, o_ref):
    """Per grid step (B_TILE images):
       one (M, 9C)@(9C, 128) conv matmul + bias + ReLU -> global avg pool ->
       backbone.fc + ReLU -> (eval) dropout -> fused [fc_xyz|fc_wpqr] -> (B_TILE, 128)."""
    M = x_ref.shape[0]
    P = wconv_ref.shape[1]
    bt = o_ref.shape[0]
    hw = M // bt

    # Fused 3x3 conv: single MXU matmul (bf16 operands, f32 accumulation).
    feat = jnp.dot(x_ref[...], wconv_ref[...], preferred_element_type=jnp.float32)
    feat = jnp.maximum(feat + bconv_ref[...], 0.0)                  # (M, P) f32, trunk ReLU

    # AdaptiveAvgPool2d(1): sublane-axis sum over HW (planes stay on lanes) * 1/HW.
    pooled = jnp.sum(feat.reshape(bt, hw, P), axis=1) * (1.0 / hw)  # (bt, P) f32

    # backbone.fc -> F.relu (bf16 MXU operands, f32 accumulate + elementwise).
    h = jnp.dot(pooled.astype(jnp.bfloat16), wfc_ref[...],
                preferred_element_type=jnp.float32) + bfc_ref[...]
    h = jnp.maximum(h, 0.0)
    # TODO(synk): F.dropout(x, p=0.5) in the torch model defaults to training=True
    # (stochastic); implemented here as identity (eval semantics).

    # fc_xyz / fc_wpqr fused into one lane-dense matmul (cols 0..5 are real).
    poses = jnp.dot(h.astype(jnp.bfloat16), whead_ref[...],
                    preferred_element_type=jnp.float32) + bhead_ref[...]
    o_ref[...] = poses


def init_params(key, in_channels):
    C = in_channels
    k = jax.random.split(key, 4)
    fan_conv = C * KH * KW
    # conv trunk weights stored per-tap: (9, C, CONV_PLANES), kaiming-style init
    w_conv = jax.random.normal(k[0], (KH * KW, C, CONV_PLANES), jnp.float32) * np.sqrt(2.0 / fan_conv)
    b_conv = jnp.zeros((1, CONV_PLANES), jnp.float32)
    # backbone.fc : Linear(fe_out_planes, feat_dim), kaiming_normal_, bias=0
    w_fc = jax.random.normal(k[1], (CONV_PLANES, FEAT_DIM), jnp.float32) * np.sqrt(2.0 / CONV_PLANES)
    b_fc = jnp.zeros((1, FEAT_DIM), jnp.float32)
    # fc_xyz / fc_wpqr : Linear(feat_dim, 3) each; concatenated on the output axis so
    # one matmul reproduces torch.cat((xyz, wpqr), 1)
    w_xyz = jax.random.normal(k[2], (FEAT_DIM, 3), jnp.float32) * np.sqrt(2.0 / FEAT_DIM)
    w_wpqr = jax.random.normal(k[3], (FEAT_DIM, 3), jnp.float32) * np.sqrt(2.0 / FEAT_DIM)
    w_head = jnp.concatenate([w_xyz, w_wpqr], axis=1)               # (FEAT_DIM, 6)
    b_head = jnp.zeros((1, 6), jnp.float32)

    params = dict(w_conv=w_conv, b_conv=b_conv, w_fc=w_fc, b_fc=b_fc,
                  w_head=w_head, b_head=b_head)

    # Lane-dense bf16 kernel copies. Padding is pure layout: padded conv planes are
    # exactly 0 after ReLU and feed zero rows of w_fc; padded head cols are sliced off.
    # Biases stay f32 so padded entries are exactly zero.
    params["w_conv_p"] = (jnp.pad(w_conv, ((0, 0), (0, 0), (0, P_PAD - CONV_PLANES)))
                          .reshape(KH * KW * C, P_PAD).astype(jnp.bfloat16))
    params["b_conv_p"] = jnp.pad(b_conv, ((0, 0), (0, P_PAD - CONV_PLANES)))
    params["w_fc_p"] = jnp.pad(w_fc, ((0, P_PAD - CONV_PLANES), (0, 0))).astype(jnp.bfloat16)
    params["b_fc_p"] = b_fc
    params["w_head_p"] = jnp.pad(w_head, ((0, 0), (0, OUT_PAD - 6))).astype(jnp.bfloat16)
    params["b_head_p"] = jnp.pad(b_head, ((0, 0), (0, OUT_PAD - 6)))
    return params


def mapnet_forward(x, params):
    """x: (N, T, C, H, W) -> poses (N, T, 6). Matches MapNet.forward."""
    N, T, C, H, W = x.shape
    B = N * T
    HW = H * W
    K9C = KH * KW * C
    B_TILE = _pick_b_tile(B)

    # im2col in the wrapper (bytes are negligible at these sizes) -> (B*HW, 9C) bf16 rows.
    xcol = _im2col(x).reshape(B * HW, K9C)

    out = pl.pallas_call(
        mapnet_fused_kernel,
        out_shape=jax.ShapeDtypeStruct((B, OUT_PAD), jnp.float32),
        grid=(B // B_TILE,),
        in_specs=[
            pl.BlockSpec((B_TILE * HW, K9C), lambda b: (b, 0)),
            pl.BlockSpec((K9C, P_PAD), lambda b: (0, 0)),
            pl.BlockSpec((1, P_PAD), lambda b: (0, 0)),
            pl.BlockSpec((P_PAD, FEAT_DIM), lambda b: (0, 0)),
            pl.BlockSpec((1, FEAT_DIM), lambda b: (0, 0)),
            pl.BlockSpec((FEAT_DIM, OUT_PAD), lambda b: (0, 0)),
            pl.BlockSpec((1, OUT_PAD), lambda b: (0, 0)),
        ],
        out_specs=pl.BlockSpec((B_TILE, OUT_PAD), lambda b: (b, 0)),
        compiler_params=pltpu.CompilerParams(
            dimension_semantics=("parallel",),          # 2 grid steps -> both TCs on v7x
            vmem_limit_bytes=32 * 1024 * 1024,          # well within 64 MiB (v7x) / 128 MiB
        ),
    )(xcol, params["w_conv_p"], params["b_conv_p"], params["w_fc_p"],
      params["b_fc_p"], params["w_head_p"], params["b_head_p"])

    poses = out[:, :6]                                  # drop lane padding
    return poses.reshape(N, T, 6)                       # poses.view(s[0], s[1], -1)


def mapnet_reference(x, params):
    """Pure-JAX reference (UNPADDED weights, identical bf16/f32 dtype path)."""
    N, T, C, H, W = x.shape
    HW = H * W
    xcol = _im2col(x)                                                   # (B, HW, 9C) bf16
    w_conv = params["w_conv"].reshape(KH * KW * C, CONV_PLANES).astype(jnp.bfloat16)
    feat = jnp.einsum('bhk,kp->bhp', xcol, w_conv, preferred_element_type=jnp.float32)
    feat = jnp.maximum(feat + params["b_conv"], 0.0)
    pooled = feat.sum(axis=1) * (1.0 / HW)                              # (B, CONV_PLANES)
    h = jnp.dot(pooled.astype(jnp.bfloat16), params["w_fc"].astype(jnp.bfloat16),
                preferred_element_type=jnp.float32) + params["b_fc"]
    h = jnp.maximum(h, 0.0)
    out = jnp.dot(h.astype(jnp.bfloat16), params["w_head"].astype(jnp.bfloat16),
                  preferred_element_type=jnp.float32) + params["b_head"]
    return out.reshape(N, T, 6)


if __name__ == "__main__":
    key = jax.random.PRNGKey(0)
    kx, kp = jax.random.split(key)
    N, T, C, H, W = 2, 8, 4, 16, 16                     # (batch, seq, channels, H, W) -> B=16
    x = jax.random.normal(kx, (N, T, C, H, W), jnp.float32)
    params = init_params(kp, C)

    fwd = jax.jit(mapnet_forward)
    poses = jax.block_until_ready(fwd(x, params))
    ref = mapnet_reference(x, params)

    assert poses.shape == (N, T, 6)
    np.testing.assert_allclose(np.asarray(poses), np.asarray(ref), rtol=1e-2, atol=1e-2)
    print("KERNEL_OK")
</pallas_src>

<mosaic_0001>
module attributes {stable_mosaic.version = 11 : i64} {
  func.func @mapnet_fused_kernel(%arg0: i32, %arg1: memref<2048x36xbf16, #tpu.memory_space<vmem>>, %arg2: memref<36x128xbf16, #tpu.memory_space<vmem>>, %arg3: memref<1x128xf32, #tpu.memory_space<vmem>>, %arg4: memref<128x128xbf16, #tpu.memory_space<vmem>>, %arg5: memref<1x128xf32, #tpu.memory_space<vmem>>, %arg6: memref<128x128xbf16, #tpu.memory_space<vmem>>, %arg7: memref<1x128xf32, #tpu.memory_space<vmem>>, %arg8: memref<8x128xf32, #tpu.memory_space<vmem>>) attributes {dimension_semantics = [#tpu.dimension_semantics<parallel>], iteration_bounds = array<i64: 2>, scalar_prefetch = 0 : i64, scratch_operands = 0 : i64, tpu.core_type = #tpu.core_type<tc>, window_params = [{transform_indices = @transform_0, window_bounds = array<i64: 2048, 36>}, {pipeline_mode = #tpu.pipeline_mode<synchronous>, transform_indices = @transform_1, window_bounds = array<i64: 36, 128>}, {pipeline_mode = #tpu.pipeline_mode<synchronous>, transform_indices = @transform_2, window_bounds = array<i64: 1, 128>}, {pipeline_mode = #tpu.pipeline_mode<synchronous>, transform_indices = @transform_3, window_bounds = array<i64: 128, 128>}, {pipeline_mode = #tpu.pipeline_mode<synchronous>, transform_indices = @transform_4, window_bounds = array<i64: 1, 128>}, {pipeline_mode = #tpu.pipeline_mode<synchronous>, transform_indices = @transform_5, window_bounds = array<i64: 128, 128>}, {pipeline_mode = #tpu.pipeline_mode<synchronous>, transform_indices = @transform_6, window_bounds = array<i64: 1, 128>}, {transform_indices = @transform_7, window_bounds = array<i64: 8, 128>}]} {
    %c0 = arith.constant 0 : index
    %c0_0 = arith.constant 0 : index
    %0 = vector.load %arg1[%c0, %c0_0] : memref<2048x36xbf16, #tpu.memory_space<vmem>>, vector<2048x36xbf16>
    %c0_1 = arith.constant 0 : index
    %c0_2 = arith.constant 0 : index
    %1 = vector.load %arg2[%c0_1, %c0_2] : memref<36x128xbf16, #tpu.memory_space<vmem>>, vector<36x128xbf16>
    %cst = arith.constant dense<0.000000e+00> : vector<2048x128xf32>
    %2 = tpu.matmul %0, %1, %cst {dimension_numbers = #tpu.dot_dimension_numbers<[1], [0], [0], [1], [0, 0, 1, 1], [], []>} : vector<2048x36xbf16>, vector<36x128xbf16>, vector<2048x128xf32> -> vector<2048x128xf32>
    %c0_3 = arith.constant 0 : index
    %c0_4 = arith.constant 0 : index
    %3 = vector.load %arg3[%c0_3, %c0_4] : memref<1x128xf32, #tpu.memory_space<vmem>>, vector<1x128xf32>
    %4 = vector.broadcast %3 : vector<1x128xf32> to vector<2048x128xf32>
    %5 = arith.addf %2, %4 : vector<2048x128xf32>
    %cst_5 = arith.constant 0.000000e+00 : f32
    %6 = vector.broadcast %cst_5 : f32 to vector<2048x128xf32>
    %7 = arith.maximumf %5, %6 : vector<2048x128xf32>
    %8 = vector.shape_cast %7 : vector<2048x128xf32> to vector<8x256x128xf32>
    %cst_6 = arith.constant dense<0.000000e+00> : vector<8x128xf32>
    %9 = vector.multi_reduction <add>, %8, %cst_6 [1] : vector<8x256x128xf32> to vector<8x128xf32>
    %cst_7 = arith.constant 3.906250e-03 : f32
    %10 = vector.broadcast %cst_7 : f32 to vector<8x128xf32>
    %11 = arith.mulf %9, %10 : vector<8x128xf32>
    %12 = arith.truncf %11 : vector<8x128xf32> to vector<8x128xbf16>
    %c0_8 = arith.constant 0 : index
    %c0_9 = arith.constant 0 : index
    %13 = vector.load %arg4[%c0_8, %c0_9] : memref<128x128xbf16, #tpu.memory_space<vmem>>, vector<128x128xbf16>
    %cst_10 = arith.constant dense<0.000000e+00> : vector<8x128xf32>
    %14 = tpu.matmul %12, %13, %cst_10 {dimension_numbers = #tpu.dot_dimension_numbers<[1], [0], [0], [1], [0, 0, 1, 1], [], []>} : vector<8x128xbf16>, vector<128x128xbf16>, vector<8x128xf32> -> vector<8x128xf32>
    %c0_11 = arith.constant 0 : index
    %c0_12 = arith.constant 0 : index
    %15 = vector.load %arg5[%c0_11, %c0_12] : memref<1x128xf32, #tpu.memory_space<vmem>>, vector<1x128xf32>
    %16 = vector.broadcast %15 : vector<1x128xf32> to vector<8x128xf32>
    %17 = arith.addf %14, %16 : vector<8x128xf32>
    %cst_13 = arith.constant 0.000000e+00 : f32
    %18 = vector.broadcast %cst_13 : f32 to vector<8x128xf32>
    %19 = arith.maximumf %17, %18 : vector<8x128xf32>
    %20 = arith.truncf %19 : vector<8x128xf32> to vector<8x128xbf16>
    %c0_14 = arith.constant 0 : index
    %c0_15 = arith.constant 0 : index
    %21 = vector.load %arg6[%c0_14, %c0_15] : memref<128x128xbf16, #tpu.memory_space<vmem>>, vector<128x128xbf16>
    %cst_16 = arith.constant dense<0.000000e+00> : vector<8x128xf32>
    %22 = tpu.matmul %20, %21, %cst_16 {dimension_numbers = #tpu.dot_dimension_numbers<[1], [0], [0], [1], [0, 0, 1, 1], [], []>} : vector<8x128xbf16>, vector<128x128xbf16>, vector<8x128xf32> -> vector<8x128xf32>
    %c0_17 = arith.constant 0 : index
    %c0_18 = arith.constant 0 : index
    %23 = vector.load %arg7[%c0_17, %c0_18] : memref<1x128xf32, #tpu.memory_space<vmem>>, vector<1x128xf32>
    %24 = vector.broadcast %23 : vector<1x128xf32> to vector<8x128xf32>
    %25 = arith.addf %22, %24 : vector<8x128xf32>
    %c0_19 = arith.constant 0 : index
    %c0_20 = arith.constant 0 : index
    %26 = vector.load %arg8[%c0_19, %c0_20] : memref<8x128xf32, #tpu.memory_space<vmem>>, vector<8x128xf32>
    tpu.vector_store %arg8[%c0_19, %c0_20], %25 {strides = array<i32>} : memref<8x128xf32, #tpu.memory_space<vmem>>, vector<8x128xf32>,
    return
  }
  func.func @transform_0(%arg0: i32) -> (i32, i32) {
    %c0_i32 = arith.constant 0 : i32
    %c0_i32_0 = arith.constant 0 : i32
    return %arg0, %c0_i32 : i32, i32
  }
  func.func @transform_1(%arg0: i32) -> (i32, i32) {
    %c0_i32 = arith.constant 0 : i32
    %c0_i32_0 = arith.constant 0 : i32
    %c0_i32_1 = arith.constant 0 : i32
    return %c0_i32, %c0_i32_0 : i32, i32
  }
  func.func @transform_2(%arg0: i32) -> (i32, i32) {
    %c0_i32 = arith.constant 0 : i32
    %c0_i32_0 = arith.constant 0 : i32
    %c0_i32_1 = arith.constant 0 : i32
    return %c0_i32, %c0_i32_0 : i32, i32
  }
  func.func @transform_3(%arg0: i32) -> (i32, i32) {
    %c0_i32 = arith.constant 0 : i32
    %c0_i32_0 = arith.constant 0 : i32
    %c0_i32_1 = arith.constant 0 : i32
    return %c0_i32, %c0_i32_0 : i32, i32
  }
  func.func @transform_4(%arg0: i32) -> (i32, i32) {
    %c0_i32 = arith.constant 0 : i32
    %c0_i32_0 = arith.constant 0 : i32
    %c0_i32_1 = arith.constant 0 : i32
    return %c0_i32, %c0_i32_0 : i32, i32
  }
  func.func @transform_5(%arg0: i32) -> (i32, i32) {
    %c0_i32 = arith.constant 0 : i32
    %c0_i32_0 = arith.constant 0 : i32
    %c0_i32_1 = arith.constant 0 : i32
    return %c0_i32, %c0_i32_0 : i32, i32
  }
  func.func @transform_6(%arg0: i32) -> (i32, i32) {
    %c0_i32 = arith.constant 0 : i32
    %c0_i32_0 = arith.constant 0 : i32
    %c0_i32_1 = arith.constant 0 : i32
    return %c0_i32, %c0_i32_0 : i32, i32
  }
  func.func @transform_7(%arg0: i32) -> (i32, i32) {
    %c0_i32 = arith.constant 0 : i32
    %c0_i32_0 = arith.constant 0 : i32
    return %arg0, %c0_i32 : i32, i32
  }
}

</mosaic_0001>

<llo_original>
// kernel: mapnet_forward.1
$region0: #{mapnet_forward.1}
  #allocation0 [shape = 'u32[]', space=smem, size = 0x4, offset = 0x4, fixed_abs, tag = 'smem constant byte address 0x4 - core index']
  #allocation1 [shape = 'u32[72,128]{1,0:T(1,128)}', space=vmem, size = 0x9000, scoped, tag = 'internal scratch']
  %s0 = inlined_call_operand.vmem [shape: bf16[4096,36], index: 0, kind: input, shape index: {}]
  %s1 = inlined_call_operand.vmem [shape: bf16[36,128], index: 1, kind: input, shape index: {}]
  %s2 = inlined_call_operand.vmem [shape: f32[1,128], index: 2, kind: input, shape index: {}]
  %s3 = inlined_call_operand.vmem [shape: bf16[128,128], index: 3, kind: input, shape index: {}]
  %s4 = inlined_call_operand.vmem [shape: f32[1,128], index: 4, kind: input, shape index: {}]
  %s5 = inlined_call_operand.vmem [shape: bf16[128,128], index: 5, kind: input, shape index: {}]
  %s6 = inlined_call_operand.vmem [shape: f32[1,128], index: 6, kind: input, shape index: {}]
  %s7 = inlined_call_operand.vmem [shape: f32[16,128], index: 7, kind: output, shape index: {}]
  %s8 = sld [smem:[#allocation0]]
  $region61: #{mapnet_forward.1} parent=0
    _
  %s10 = ssub.s32 1, %s8
  %s11 = scalar_select 0, %s10, %s8
  loop: start=0, step=1, limit=4
  $region2: #{mapnet_forward.1} parent=0 // loop_pre_header
    _
  $region3: #{mapnet_forward.1} parent=0 // loop_header
    %s13 = sphi 0, %s17
    %p14 = scmp.ge.s32.totalorder %s13, 4
    %s23 = sphi 0, %s25
    %s26 = sphi 0, %s23
    %s27 = sphi 0, %s26
    %s43 = sphi 0, %s27
    %s47 = sphi 0, %s47
    %s49 = sphi 0, %s47
    %s50 = sphi 0, %s49
    %s64 = sphi 0, %s50
    %s68 = sphi 0, %s68
    %s70 = sphi 0, %s68
    %s71 = sphi 0, %s70
    %s85 = sphi 0, %s71
    %s89 = sphi 0, %s89
    %s91 = sphi 0, %s89
    %s92 = sphi 0, %s91
    %s106 = sphi 0, %s92
    %s110 = sphi 0, %s110
    %s112 = sphi 0, %s110
    %s113 = sphi 0, %s112
    %s127 = sphi 0, %s113
    %s131 = sphi 0, %s131
    %s133 = sphi 0, %s131
    %s134 = sphi 0, %s133
    %s148 = sphi 0, %s134
    %s152 = sphi 0, %s152
    %s154 = sphi 0, %s152
    %s155 = sphi 0, %s154
    %s169 = sphi 0, %s155
    %s175 = sphi 0, %s177
    %s178 = sphi 0, %s175
    %s179 = sphi 0, %s178
    %s195 = sphi 0, %s179
  $region4: #{mapnet_forward.1} parent=0 // loop_header_branch
    %16 = sbr.rel (%p14) target = $region8
  $region5: #{mapnet_forward.1} parent=0 // loop_body
    %s18 = ssub.s32 %s13, 1
    %s19 = ssub.s32 %s13, 2
    %s20 = sadd.s32 %s13, 1
    %s21 = ssub.s32 %s13, %s20
    %p22 = scmp.eq.s32.totalorder %s21, 0
    %s24 = sadd.s32 %s23, 1
    %s25 = scalar_select %p22, %s23, %s24
    %p28 = pneg %p22
    %p29 = scmp.eq.s32.totalorder %s13, 1
    %p30 = por %p28, %p29
    %p31 = scmp.ne.s32.totalorder %s23, %s26
    %p32 = scmp.eq.s32.totalorder %s13, 0
    %p33 = por %p31, %p32
    %p34 = scmp.ne.s32.totalorder %s23, %s26
    %p35 = scmp.eq.s32.totalorder %s18, 1
    %p36 = por %p34, %p35
    %p37 = scmp.ne.s32.totalorder %s26, %s27
    %p38 = scmp.eq.s32.totalorder %s18, 0
    %p39 = por %p37, %p38
    %p40 = scmp.ne.s32.totalorder %s26, %s27
    %p41 = scmp.eq.s32.totalorder %s19, 1
    %p42 = por %p40, %p41
    %p44 = scmp.ne.s32.totalorder %s27, %s43
    %p45 = scmp.eq.s32.totalorder %s19, 0
    %p46 = por %p44, %p45
    %s48 = sadd.s32 %s47, 1
    %p51 = scmp.eq.s32.totalorder %s13, 1
    %p52 = scmp.ne.s32.totalorder %s47, %s49
    %p53 = scmp.eq.s32.totalorder %s13, 0
    %p54 = por %p52, %p53
    %p55 = scmp.ne.s32.totalorder %s47, %s49
    %p56 = scmp.eq.s32.totalorder %s18, 1
    %p57 = por %p55, %p56
    %p58 = scmp.ne.s32.totalorder %s49, %s50
    %p59 = scmp.eq.s32.totalorder %s18, 0
    %p60 = por %p58, %p59
    %p61 = scmp.ne.s32.totalorder %s49, %s50
    %p62 = scmp.eq.s32.totalorder %s19, 1
    %p63 = por %p61, %p62
    %p65 = scmp.ne.s32.totalorder %s50, %s64
    %p66 = scmp.eq.s32.totalorder %s19, 0
    %p67 = por %p65, %p66
    %s69 = sadd.s32 %s68, 1
    %p72 = scmp.eq.s32.totalorder %s13, 1
    %p73 = scmp.ne.s32.totalorder %s68, %s70
    %p74 = scmp.eq.s32.totalorder %s13, 0
    %p75 = por %p73, %p74
    %p76 = scmp.ne.s32.totalorder %s68, %s70
    %p77 = scmp.eq.s32.totalorder %s18, 1
    %p78 = por %p76, %p77
    %p79 = scmp.ne.s32.totalorder %s70, %s71
    %p80 = scmp.eq.s32.totalorder %s18, 0
    %p81 = por %p79, %p80
    %p82 = scmp.ne.s32.totalorder %s70, %s71
    %p83 = scmp.eq.s32.totalorder %s19, 1
    %p84 = por %p82, %p83
    %p86 = scmp.ne.s32.totalorder %s71, %s85
    %p87 = scmp.eq.s32.totalorder %s19, 0
    %p88 = por %p86, %p87
    %s90 = sadd.s32 %s89, 1
    %p93 = scmp.eq.s32.totalorder %s13, 1
    %p94 = scmp.ne.s32.totalorder %s89, %s91
    %p95 = scmp.eq.s32.totalorder %s13, 0
    %p96 = por %p94, %p95
    %p97 = scmp.ne.s32.totalorder %s89, %s91
    %p98 = scmp.eq.s32.totalorder %s18, 1
    %p99 = por %p97, %p98
    %p100 = scmp.ne.s32.totalorder %s91, %s92
    %p101 = scmp.eq.s32.totalorder %s18, 0
    %p102 = por %p100, %p101
    %p103 = scmp.ne.s32.totalorder %s91, %s92
    %p104 = scmp.eq.s32.totalorder %s19, 1
    %p105 = por %p103, %p104
    %p107 = scmp.ne.s32.totalorder %s92, %s106
    %p108 = scmp.eq.s32.totalorder %s19, 0
    %p109 = por %p107, %p108
    %s111 = sadd.s32 %s110, 1
    %p114 = scmp.eq.s32.totalorder %s13, 1
    %p115 = scmp.ne.s32.totalorder %s110, %s112
    %p116 = scmp.eq.s32.totalorder %s13, 0
    %p117 = por %p115, %p116
    %p118 = scmp.ne.s32.totalorder %s110, %s112
    %p119 = scmp.eq.s32.totalorder %s18, 1
    %p120 = por %p118, %p119
    %p121 = scmp.ne.s32.totalorder %s112, %s113
    %p122 = scmp.eq.s32.totalorder %s18, 0
    %p123 = por %p121, %p122
    %p124 = scmp.ne.s32.totalorder %s112, %s113
    %p125 = scmp.eq.s32.totalorder %s19, 1
    %p126 = por %p124, %p125
    %p128 = scmp.ne.s32.totalorder %s113, %s127
    %p129 = scmp.eq.s32.totalorder %s19, 0
    %p130 = por %p128, %p129
    %s132 = sadd.s32 %s131, 1
    %p135 = scmp.eq.s32.totalorder %s13, 1
    %p136 = scmp.ne.s32.totalorder %s131, %s133
    %p137 = scmp.eq.s32.totalorder %s13, 0
    %p138 = por %p136, %p137
    %p139 = scmp.ne.s32.totalorder %s131, %s133
    %p140 = scmp.eq.s32.totalorder %s18, 1
    %p141 = por %p139, %p140
    %p142 = scmp.ne.s32.totalorder %s133, %s134
    %p143 = scmp.eq.s32.totalorder %s18, 0
    %p144 = por %p142, %p143
    %p145 = scmp.ne.s32.totalorder %s133, %s134
    %p146 = scmp.eq.s32.totalorder %s19, 1
    %p147 = por %p145, %p146
    %p149 = scmp.ne.s32.totalorder %s134, %s148
    %p150 = scmp.eq.s32.totalorder %s19, 0
    %p151 = por %p149, %p150
    %s153 = sadd.s32 %s152, 1
    %p156 = scmp.eq.s32.totalorder %s13, 1
    %p157 = scmp.ne.s32.totalorder %s152, %s154
    %p158 = scmp.eq.s32.totalorder %s13, 0
    %p159 = por %p157, %p158
    %p160 = scmp.ne.s32.totalorder %s152, %s154
    %p161 = scmp.eq.s32.totalorder %s18, 1
    %p162 = por %p160, %p161
    %p163 = scmp.ne.s32.totalorder %s154, %s155
    %p164 = scmp.eq.s32.totalorder %s18, 0
    %p165 = por %p163, %p164
    %p166 = scmp.ne.s32.totalorder %s154, %s155
    %p167 = scmp.eq.s32.totalorder %s19, 1
    %p168 = por %p166, %p167
    %p170 = scmp.ne.s32.totalorder %s155, %s169
    %p171 = scmp.eq.s32.totalorder %s19, 0
    %p172 = por %p170, %p171
    %s173 = ssub.s32 %s13, %s20
    %p174 = scmp.eq.s32.totalorder %s173, 0
    %s176 = sadd.s32 %s175, 1
    %s177 = scalar_select %p174, %s175, %s176
    %p180 = pneg %p174
    %p181 = scmp.eq.s32.totalorder %s13, 1
    %p182 = por %p180, %p181
    %p183 = scmp.ne.s32.totalorder %s175, %s178
    %p184 = scmp.eq.s32.totalorder %s13, 0
    %p185 = por %p183, %p184
    %p186 = scmp.ne.s32.totalorder %s175, %s178
    %p187 = scmp.eq.s32.totalorder %s18, 1
    %p188 = por %p186, %p187
    %p189 = scmp.ne.s32.totalorder %s178, %s179
    %p190 = scmp.eq.s32.totalorder %s18, 0
    %p191 = por %p189, %p190
    %p192 = scmp.ne.s32.totalorder %s178, %s179
    %p193 = scmp.eq.s32.totalorder %s19, 1
    %p194 = por %p192, %p193
    %p196 = scmp.ne.s32.totalorder %s179, %s195
    %p197 = scmp.eq.s32.totalorder %s19, 0
    %p198 = por %p196, %p197
    %p199 = scmp.le.s32.totalorder 1, %s13
    %p200 = scmp.lt.s32.totalorder %s13, 3
    %p201 = pnand %p199, %p200
    %p202 = pneg %p201
    // Predicated region
    $region9: #{mapnet_forward.1} parent=5 // pred_check
      _
    $region10: #{mapnet_forward.1} parent=5 // pred_check_branch
      %204 = sbr.rel (%p201) target = $region12
    $region11: #{mapnet_forward.1} parent=5 // pred_region
      %s205 = ssub.s32 %s13, 1
      // Predicated region
      $region13: #{mapnet_forward.1} parent=11 // pred_check
        %p206 = pneg %p60
      $region14: #{mapnet_forward.1} parent=11 // pred_check_branch
        %208 = sbr.rel (%p206) target = $region16
      $region15: #{mapnet_forward.1} parent=11 // pred_region
        _
      $region16: #{mapnet_forward.1} parent=11 // pred_fallthru
        _
      // Predicated region
      $region17: #{mapnet_forward.1} parent=11 // pred_check
        %p209 = pneg %p81
      $region18: #{mapnet_forward.1} parent=11 // pred_check_branch
        %211 = sbr.rel (%p209) target = $region20
      $region19: #{mapnet_forward.1} parent=11 // pred_region
        _
      $region20: #{mapnet_forward.1} parent=11 // pred_fallthru
        _
      // Predicated region
      $region21: #{mapnet_forward.1} parent=11 // pred_check
        %p212 = pneg %p102
      $region22: #{mapnet_forward.1} parent=11 // pred_check_branch
        %214 = sbr.rel (%p212) target = $region24
      $region23: #{mapnet_forward.1} parent=11 // pred_region
        _
      $region24: #{mapnet_forward.1} parent=11 // pred_fallthru
        _
      // Predicated region
      $region25: #{mapnet_forward.1} parent=11 // pred_check
        %p215 = pneg %p123
      $region26: #{mapnet_forward.1} parent=11 // pred_check_branch
        %217 = sbr.rel (%p215) target = $region28
      $region27: #{mapnet_forward.1} parent=11 // pred_region
        _
      $region28: #{mapnet_forward.1} parent=11 // pred_fallthru
        _
      // Predicated region
      $region29: #{mapnet_forward.1} parent=11 // pred_check
        %p218 = pneg %p144
      $region30: #{mapnet_forward.1} parent=11 // pred_check_branch
        %220 = sbr.rel (%p218) target = $region32
      $region31: #{mapnet_forward.1} parent=11 // pred_region
        _
      $region32: #{mapnet_forward.1} parent=11 // pred_fallthru
        _
      // Predicated region
      $region33: #{mapnet_forward.1} parent=11 // pred_check
        %p221 = pneg %p165
      $region34: #{mapnet_forward.1} parent=11 // pred_check_branch
        %223 = sbr.rel (%p221) target = $region36
      $region35: #{mapnet_forward.1} parent=11 // pred_region
        _
      $region36: #{mapnet_forward.1} parent=11 // pred_fallthru
        _
    $region12: #{mapnet_forward.1} parent=5 // pred_fallthru
      _
    %p224 = scmp.lt.s32.totalorder %s13, 2
    // Predicated region
    $region37: #{mapnet_forward.1} parent=5 // pred_check
      %p225 = pneg %p224
    $region38: #{mapnet_forward.1} parent=5 // pred_check_branch
      %227 = sbr.rel (%p225) target = $region40
    $region39: #{mapnet_forward.1} parent=5 // pred_region
      // Predicated region
      $region41: #{mapnet_forward.1} parent=39 // pred_check
        %p228 = pneg %p33
      $region42: #{mapnet_forward.1} parent=39 // pred_check_branch
        %230 = sbr.rel (%p228) target = $region44
      $region43: #{mapnet_forward.1} parent=39 // pred_region
        %s231 = smul.u32 256, %s13
        %p232 = scmp.lt.s32.totalorder %s231, 511
        %s233 = scalar_select %p232, %s231, 511
        %s234 = smul.addr %s233, 4
        %s235 = scalar_lea.vmem %s0, %s234
        %s236 = smul.u32 256, %s13
      $region44: #{mapnet_forward.1} parent=39 // pred_fallthru
        _
    $region40: #{mapnet_forward.1} parent=5 // pred_fallthru
      _
    %p237 = scmp.le.s32.totalorder 1, %s13
    %p238 = scmp.lt.s32.totalorder %s13, 3
    %p239 = pnand %p237, %p238
    %p240 = pneg %p239
    // Predicated region
    $region45: #{mapnet_forward.1} parent=5 // pred_check
      _
    $region46: #{mapnet_forward.1} parent=5 // pred_check_branch
      %242 = sbr.rel (%p239) target = $region48
    $region47: #{mapnet_forward.1} parent=5 // pred_region
      %s243 = ssub.s32 %s13, 1
      %s244 = smul.u32 256, %s18
      %p245 = scmp.lt.s32.totalorder %s244, 511
      %s246 = scalar_select %p245, %s244, 511
      %s247 = smul.addr %s246, 4
      %s248 = scalar_lea.vmem %s0, %s247
      %p249 = pneg %p39
      %p250 = pneg %p36
      %p251 = pneg %p60
      %p252 = pneg %p57
      %p253 = pneg %p81
      %p254 = pneg %p78
      %p255 = pneg %p102
      %p256 = pneg %p99
      %p257 = pneg %p123
      %p258 = pneg %p120
      %p259 = pneg %p144
      %p260 = pneg %p141
      %p261 = pneg %p165
      %p262 = pneg %p162
      %p263 = pneg %p191
      %p264 = pneg %p188
      %p265 = scmp.lt.s32.totalorder %s18, 1
      %s266 = scalar_select %p265, %s18, 1
      %s267 = smul.addr %s266, 8
      %s268 = scalar_lea.vmem %s7, %s267
      %s269 = smul.u32 256, %s18
      %p270 = scmp.lt.s32.totalorder %s269, 511
      %s271 = scalar_select %p270, %s269, 511
      %s272 = smul.addr %s271, 4
      %s273 = scalar_lea.vmem %s0, %s272
      %s274 = smul.u32 256, %s18
      %p275 = scmp.lt.s32.totalorder %s18, 1
      %s276 = scalar_select %p275, %s18, 1
      %s277 = smul.addr %s276, 8
      %s278 = scalar_lea.vmem %s7, %s277
      %v280 = vld [vmem:[%s273] sm:$0xf]
      %v281 = vld [vmem:[%s273 + $0x4] sm:$0xf]
      %v282 = vld [vmem:[%s273 + $0x8] sm:$0xf]
      %v283 = vld [vmem:[%s273 + $0xc] sm:$0xf]
      %v284 = vld [vmem:[%s273 + $0x10] sm:$0xf]
      %v285 = vld [vmem:[%s273 + $0x14] sm:$0xf]
      %v286 = vld [vmem:[%s273 + $0x18] sm:$0xf]
      %v287 = vld [vmem:[%s273 + $0x1c] sm:$0xf]
      %v288 = vld [vmem:[%s273 + $0x20] sm:$0xf]
      %v289 = vld [vmem:[%s273 + $0x24] sm:$0xf]
      %v290 = vld [vmem:[%s273 + $0x28] sm:$0xf]
      %v291 = vld [vmem:[%s273 + $0x2c] sm:$0xf]
      %v292 = vld [vmem:[%s273 + $0x30] sm:$0xf]
      %v293 = vld [vmem:[%s273 + $0x34] sm:$0xf]
      %v294 = vld [vmem:[%s273 + $0x38] sm:$0xf]
      %v295 = vld [vmem:[%s273 + $0x3c] sm:$0xf]
      %v296 = vld [vmem:[%s273 + $0x40] sm:$0xf]
      %v297 = vld [vmem:[%s273 + $0x44] sm:$0xf]
      %v298 = vld [vmem:[%s273 + $0x48] sm:$0xf]
      %v299 = vld [vmem:[%s273 + $0x4c] sm:$0xf]
      %v300 = vld [vmem:[%s273 + $0x50] sm:$0xf]
      %v301 = vld [vmem:[%s273 + $0x54] sm:$0xf]
      %v302 = vld [vmem:[%s273 + $0x58] sm:$0xf]
      %v303 = vld [vmem:[%s273 + $0x5c] sm:$0xf]
      %v304 = vld [vmem:[%s273 + $0x60] sm:$0xf]
      %v305 = vld [vmem:[%s273 + $0x64] sm:$0xf]
      %v306 = vld [vmem:[%s273 + $0x68] sm:$0xf]
      %v307 = vld [vmem:[%s273 + $0x6c] sm:$0xf]
      %v308 = vld [vmem:[%s273 + $0x70] sm:$0xf]
      %v309 = vld [vmem:[%s273 + $0x74] sm:$0xf]
      %v310 = vld [vmem:[%s273 + $0x78] sm:$0xf]
      %v311 = vld [vmem:[%s273 + $0x7c] sm:$0xf]
      %v312 = vld [vmem:[%s273 + $0x80] sm:$0xf]
      %v313 = vld [vmem:[%s273 + $0x84] sm:$0xf]
      %v314 = vld [vmem:[%s273 + $0x88] sm:$0xf]
      %v315 = vld [vmem:[%s273 + $0x8c] sm:$0xf]
      %v316 = vld [vmem:[%s273 + $0x90] sm:$0xf]
      %v317 = vld [vmem:[%s273 + $0x94] sm:$0xf]
      %v318 = vld [vmem:[%s273 + $0x98] sm:$0xf]
      %v319 = vld [vmem:[%s273 + $0x9c] sm:$0xf]
      %v320 = vld [vmem:[%s273 + $0xa0] sm:$0xf]
      %v321 = vld [vmem:[%s273 + $0xa4] sm:$0xf]
      %v322 = vld [vmem:[%s273 + $0xa8] sm:$0xf]
      %v323 = vld [vmem:[%s273 + $0xac] sm:$0xf]
      %v324 = vld [vmem:[%s273 + $0xb0] sm:$0xf]
      %v325 = vld [vmem:[%s273 + $0xb4] sm:$0xf]
      %v326 = vld [vmem:[%s273 + $0xb8] sm:$0xf]
      %v327 = vld [vmem:[%s273 + $0xbc] sm:$0xf]
      %v328 = vld [vmem:[%s273 + $0xc0] sm:$0xf]
      %v329 = vld [vmem:[%s273 + $0xc4] sm:$0xf]
      %v330 = vld [vmem:[%s273 + $0xc8] sm:$0xf]
      %v331 = vld [vmem:[%s273 + $0xcc] sm:$0xf]
      %v332 = vld [vmem:[%s273 + $0xd0] sm:$0xf]
      %v333 = vld [vmem:[%s273 + $0xd4] sm:$0xf]
      %v334 = vld [vmem:[%s273 + $0xd8] sm:$0xf]
      %v335 = vld [vmem:[%s273 + $0xdc] sm:$0xf]
      %v336 = vld [vmem:[%s273 + $0xe0] sm:$0xf]
      %v337 = vld [vmem:[%s273 + $0xe4] sm:$0xf]
      %v338 = vld [vmem:[%s273 + $0xe8] sm:$0xf]
      %v339 = vld [vmem:[%s273 + $0xec] sm:$0xf]
      %v340 = vld [vmem:[%s273 + $0xf0] sm:$0xf]
      %v341 = vld [vmem:[%s273 + $0xf4] sm:$0xf]
      %v342 = vld [vmem:[%s273 + $0xf8] sm:$0xf]
      %v343 = vld [vmem:[%s273 + $0xfc] sm:$0xf]
      %v344 = vld [vmem:[%s273 + $0x100] sm:$0xf]
      %v345 = vld [vmem:[%s273 + $0x104] sm:$0xf]
      %v346 = vld [vmem:[%s273 + $0x108] sm:$0xf]
      %v347 = vld [vmem:[%s273 + $0x10c] sm:$0xf]
      %v348 = vld [vmem:[%s273 + $0x110] sm:$0xf]
      %v349 = vld [vmem:[%s273 + $0x114] sm:$0xf]
      %v350 = vld [vmem:[%s273 + $0x118] sm:$0xf]
      %v351 = vld [vmem:[%s273 + $0x11c] sm:$0xf]
      %v352 = vld [vmem:[%s273 + $0x120] sm:$0xf]
      %v353 = vld [vmem:[%s273 + $0x124] sm:$0xf]
      %v354 = vld [vmem:[%s273 + $0x128] sm:$0xf]
      %v355 = vld [vmem:[%s273 + $0x12c] sm:$0xf]
      %v356 = vld [vmem:[%s273 + $0x130] sm:$0xf]
      %v357 = vld [vmem:[%s273 + $0x134] sm:$0xf]
      %v358 = vld [vmem:[%s273 + $0x138] sm:$0xf]
      %v359 = vld [vmem:[%s273 + $0x13c] sm:$0xf]
      %v360 = vld [vmem:[%s273 + $0x140] sm:$0xf]
      %v361 = vld [vmem:[%s273 + $0x144] sm:$0xf]
      %v362 = vld [vmem:[%s273 + $0x148] sm:$0xf]
      %v363 = vld [vmem:[%s273 + $0x14c] sm:$0xf]
      %v364 = vld [vmem:[%s273 + $0x150] sm:$0xf]
      %v365 = vld [vmem:[%s273 + $0x154] sm:$0xf]
      %v366 = vld [vmem:[%s273 + $0x158] sm:$0xf]
      %v367 = vld [vmem:[%s273 + $0x15c] sm:$0xf]
      %v368 = vld [vmem:[%s273 + $0x160] sm:$0xf]
      %v369 = vld [vmem:[%s273 + $0x164] sm:$0xf]
      %v370 = vld [vmem:[%s273 + $0x168] sm:$0xf]
      %v371 = vld [vmem:[%s273 + $0x16c] sm:$0xf]
      %v372 = vld [vmem:[%s273 + $0x170] sm:$0xf]
      %v373 = vld [vmem:[%s273 + $0x174] sm:$0xf]
      %v374 = vld [vmem:[%s273 + $0x178] sm:$0xf]
      %v375 = vld [vmem:[%s273 + $0x17c] sm:$0xf]
      %v376 = vld [vmem:[%s273 + $0x180] sm:$0xf]
      %v377 = vld [vmem:[%s273 + $0x184] sm:$0xf]
      %v378 = vld [vmem:[%s273 + $0x188] sm:$0xf]
      %v379 = vld [vmem:[%s273 + $0x18c] sm:$0xf]
      %v380 = vld [vmem:[%s273 + $0x190] sm:$0xf]
      %v381 = vld [vmem:[%s273 + $0x194] sm:$0xf]
      %v382 = vld [vmem:[%s273 + $0x198] sm:$0xf]
      %v383 = vld [vmem:[%s273 + $0x19c] sm:$0xf]
      %v384 = vld [vmem:[%s273 + $0x1a0] sm:$0xf]
      %v385 = vld [vmem:[%s273 + $0x1a4] sm:$0xf]
      %v386 = vld [vmem:[%s273 + $0x1a8] sm:$0xf]
      %v387 = vld [vmem:[%s273 + $0x1ac] sm:$0xf]
      %v388 = vld [vmem:[%s273 + $0x1b0] sm:$0xf]
      %v389 = vld [vmem:[%s273 + $0x1b4] sm:$0xf]
      %v390 = vld [vmem:[%s273 + $0x1b8] sm:$0xf]
      %v391 = vld [vmem:[%s273 + $0x1bc] sm:$0xf]
      %v392 = vld [vmem:[%s273 + $0x1c0] sm:$0xf]
      %v393 = vld [vmem:[%s273 + $0x1c4] sm:$0xf]
      %v394 = vld [vmem:[%s273 + $0x1c8] sm:$0xf]
      %v395 = vld [vmem:[%s273 + $0x1cc] sm:$0xf]
      %v396 = vld [vmem:[%s273 + $0x1d0] sm:$0xf]
      %v397 = vld [vmem:[%s273 + $0x1d4] sm:$0xf]
      %v398 = vld [vmem:[%s273 + $0x1d8] sm:$0xf]
      %v399 = vld [vmem:[%s273 + $0x1dc] sm:$0xf]
      %v400 = vld [vmem:[%s273 + $0x1e0] sm:$0xf]
      %v401 = vld [vmem:[%s273 + $0x1e4] sm:$0xf]
      %v402 = vld [vmem:[%s273 + $0x1e8] sm:$0xf]
      %v403 = vld [vmem:[%s273 + $0x1ec] sm:$0xf]
      %v404 = vld [vmem:[%s273 + $0x1f0] sm:$0xf]
      %v405 = vld [vmem:[%s273 + $0x1f4] sm:$0xf]
      %v406 = vld [vmem:[%s273 + $0x1f8] sm:$0xf]
      %v407 = vld [vmem:[%s273 + $0x1fc] sm:$0xf]
      %v408 = vld [vmem:[%s273 + $0x200] sm:$0xf]
      %v409 = vld [vmem:[%s273 + $0x204] sm:$0xf]
      %v410 = vld [vmem:[%s273 + $0x208] sm:$0xf]
      %v411 = vld [vmem:[%s273 + $0x20c] sm:$0xf]
      %v412 = vld [vmem:[%s273 + $0x210] sm:$0xf]
      %v413 = vld [vmem:[%s273 + $0x214] sm:$0xf]
      %v414 = vld [vmem:[%s273 + $0x218] sm:$0xf]
      %v415 = vld [vmem:[%s273 + $0x21c] sm:$0xf]
      %v416 = vld [vmem:[%s273 + $0x220] sm:$0xf]
      %v417 = vld [vmem:[%s273 + $0x224] sm:$0xf]
      %v418 = vld [vmem:[%s273 + $0x228] sm:$0xf]
      %v419 = vld [vmem:[%s273 + $0x22c] sm:$0xf]
      %v420 = vld [vmem:[%s273 + $0x230] sm:$0xf]
      %v421 = vld [vmem:[%s273 + $0x234] sm:$0xf]
      %v422 = vld [vmem:[%s273 + $0x238] sm:$0xf]
      %v423 = vld [vmem:[%s273 + $0x23c] sm:$0xf]
      %v424 = vld [vmem:[%s273 + $0x240] sm:$0xf]
      %v425 = vld [vmem:[%s273 + $0x244] sm:$0xf]
      %v426 = vld [vmem:[%s273 + $0x248] sm:$0xf]
      %v427 = vld [vmem:[%s273 + $0x24c] sm:$0xf]
      %v428 = vld [vmem:[%s273 + $0x250] sm:$0xf]
      %v429 = vld [vmem:[%s273 + $0x254] sm:$0xf]
      %v430 = vld [vmem:[%s273 + $0x258] sm:$0xf]
      %v431 = vld [vmem:[%s273 + $0x25c] sm:$0xf]
      %v432 = vld [vmem:[%s273 + $0x260] sm:$0xf]
      %v433 = vld [vmem:[%s273 + $0x264] sm:$0xf]
      %v434 = vld [vmem:[%s273 + $0x268] sm:$0xf]
      %v435 = vld [vmem:[%s273 + $0x26c] sm:$0xf]
      %v436 = vld [vmem:[%s273 + $0x270] sm:$0xf]
      %v437 = vld [vmem:[%s273 + $0x274] sm:$0xf]
      %v438 = vld [vmem:[%s273 + $0x278] sm:$0xf]
      %v439 = vld [vmem:[%s273 + $0x27c] sm:$0xf]
      %v440 = vld [vmem:[%s273 + $0x280] sm:$0xf]
      %v441 = vld [vmem:[%s273 + $0x284] sm:$0xf]
      %v442 = vld [vmem:[%s273 + $0x288] sm:$0xf]
      %v443 = vld [vmem:[%s273 + $0x28c] sm:$0xf]
      %v444 = vld [vmem:[%s273 + $0x290] sm:$0xf]
      %v445 = vld [vmem:[%s273 + $0x294] sm:$0xf]
      %v446 = vld [vmem:[%s273 + $0x298] sm:$0xf]
      %v447 = vld [vmem:[%s273 + $0x29c] sm:$0xf]
      %v448 = vld [vmem:[%s273 + $0x2a0] sm:$0xf]
      %v449 = vld [vmem:[%s273 + $0x2a4] sm:$0xf]
      %v450 = vld [vmem:[%s273 + $0x2a8] sm:$0xf]
      %v451 = vld [vmem:[%s273 + $0x2ac] sm:$0xf]
      %v452 = vld [vmem:[%s273 + $0x2b0] sm:$0xf]
      %v453 = vld [vmem:[%s273 + $0x2b4] sm:$0xf]
      %v454 = vld [vmem:[%s273 + $0x2b8] sm:$0xf]
      %v455 = vld [vmem:[%s273 + $0x2bc] sm:$0xf]
      %v456 = vld [vmem:[%s273 + $0x2c0] sm:$0xf]
      %v457 = vld [vmem:[%s273 + $0x2c4] sm:$0xf]
      %v458 = vld [vmem:[%s273 + $0x2c8] sm:$0xf]
      %v459 = vld [vmem:[%s273 + $0x2cc] sm:$0xf]
      %v460 = vld [vmem:[%s273 + $0x2d0] sm:$0xf]
      %v461 = vld [vmem:[%s273 + $0x2d4] sm:$0xf]
      %v462 = vld [vmem:[%s273 + $0x2d8] sm:$0xf]
      %v463 = vld [vmem:[%s273 + $0x2dc] sm:$0xf]
      %v464 = vld [vmem:[%s273 + $0x2e0] sm:$0xf]
      %v465 = vld [vmem:[%s273 + $0x2e4] sm:$0xf]
      %v466 = vld [vmem:[%s273 + $0x2e8] sm:$0xf]
      %v467 = vld [vmem:[%s273 + $0x2ec] sm:$0xf]
      %v468 = vld [vmem:[%s273 + $0x2f0] sm:$0xf]
      %v469 = vld [vmem:[%s273 + $0x2f4] sm:$0xf]
      %v470 = vld [vmem:[%s273 + $0x2f8] sm:$0xf]
      %v471 = vld [vmem:[%s273 + $0x2fc] sm:$0xf]
      %v472 = vld [vmem:[%s273 + $0x300] sm:$0xf]
      %v473 = vld [vmem:[%s273 + $0x304] sm:$0xf]
      %v474 = vld [vmem:[%s273 + $0x308] sm:$0xf]
      %v475 = vld [vmem:[%s273 + $0x30c] sm:$0xf]
      %v476 = vld [vmem:[%s273 + $0x310] sm:$0xf]
      %v477 = vld [vmem:[%s273 + $0x314] sm:$0xf]
      %v478 = vld [vmem:[%s273 + $0x318] sm:$0xf]
      %v479 = vld [vmem:[%s273 + $0x31c] sm:$0xf]
      %v480 = vld [vmem:[%s273 + $0x320] sm:$0xf]
      %v481 = vld [vmem:[%s273 + $0x324] sm:$0xf]
      %v482 = vld [vmem:[%s273 + $0x328] sm:$0xf]
      %v483 = vld [vmem:[%s273 + $0x32c] sm:$0xf]
      %v484 = vld [vmem:[%s273 + $0x330] sm:$0xf]
      %v485 = vld [vmem:[%s273 + $0x334] sm:$0xf]
      %v486 = vld [vmem:[%s273 + $0x338] sm:$0xf]
      %v487 = vld [vmem:[%s273 + $0x33c] sm:$0xf]
      %v488 = vld [vmem:[%s273 + $0x340] sm:$0xf]
      %v489 = vld [vmem:[%s273 + $0x344] sm:$0xf]
      %v490 = vld [vmem:[%s273 + $0x348] sm:$0xf]
      %v491 = vld [vmem:[%s273 + $0x34c] sm:$0xf]
      %v492 = vld [vmem:[%s273 + $0x350] sm:$0xf]
      %v493 = vld [vmem:[%s273 + $0x354] sm:$0xf]
      %v494 = vld [vmem:[%s273 + $0x358] sm:$0xf]
      %v495 = vld [vmem:[%s273 + $0x35c] sm:$0xf]
      %v496 = vld [vmem:[%s273 + $0x360] sm:$0xf]
      %v497 = vld [vmem:[%s273 + $0x364] sm:$0xf]
      %v498 = vld [vmem:[%s273 + $0x368] sm:$0xf]
      %v499 = vld [vmem:[%s273 + $0x36c] sm:$0xf]
      %v500 = vld [vmem:[%s273 + $0x370] sm:$0xf]
      %v501 = vld [vmem:[%s273 + $0x374] sm:$0xf]
      %v502 = vld [vmem:[%s273 + $0x378] sm:$0xf]
      %v503 = vld [vmem:[%s273 + $0x37c] sm:$0xf]
      %v504 = vld [vmem:[%s273 + $0x380] sm:$0xf]
      %v505 = vld [vmem:[%s273 + $0x384] sm:$0xf]
      %v506 = vld [vmem:[%s273 + $0x388] sm:$0xf]
      %v507 = vld [vmem:[%s273 + $0x38c] sm:$0xf]
      %v508 = vld [vmem:[%s273 + $0x390] sm:$0xf]
      %v509 = vld [vmem:[%s273 + $0x394] sm:$0xf]
      %v510 = vld [vmem:[%s273 + $0x398] sm:$0xf]
      %v511 = vld [vmem:[%s273 + $0x39c] sm:$0xf]
      %v512 = vld [vmem:[%s273 + $0x3a0] sm:$0xf]
      %v513 = vld [vmem:[%s273 + $0x3a4] sm:$0xf]
      %v514 = vld [vmem:[%s273 + $0x3a8] sm:$0xf]
      %v515 = vld [vmem:[%s273 + $0x3ac] sm:$0xf]
      %v516 = vld [vmem:[%s273 + $0x3b0] sm:$0xf]
      %v517 = vld [vmem:[%s273 + $0x3b4] sm:$0xf]
      %v518 = vld [vmem:[%s273 + $0x3b8] sm:$0xf]
      %v519 = vld [vmem:[%s273 + $0x3bc] sm:$0xf]
      %v520 = vld [vmem:[%s273 + $0x3c0] sm:$0xf]
      %v521 = vld [vmem:[%s273 + $0x3c4] sm:$0xf]
      %v522 = vld [vmem:[%s273 + $0x3c8] sm:$0xf]
      %v523 = vld [vmem:[%s273 + $0x3cc] sm:$0xf]
      %v524 = vld [vmem:[%s273 + $0x3d0] sm:$0xf]
      %v525 = vld [vmem:[%s273 + $0x3d4] sm:$0xf]
      %v526 = vld [vmem:[%s273 + $0x3d8] sm:$0xf]
      %v527 = vld [vmem:[%s273 + $0x3dc] sm:$0xf]
      %v528 = vld [vmem:[%s273 + $0x3e0] sm:$0xf]
      %v529 = vld [vmem:[%s273 + $0x3e4] sm:$0xf]
      %v530 = vld [vmem:[%s273 + $0x3e8] sm:$0xf]
      %v531 = vld [vmem:[%s273 + $0x3ec] sm:$0xf]
      %v532 = vld [vmem:[%s273 + $0x3f0] sm:$0xf]
      %v533 = vld [vmem:[%s273 + $0x3f4] sm:$0xf]
      %v534 = vld [vmem:[%s273 + $0x3f8] sm:$0xf]
      %v535 = vld [vmem:[%s273 + $0x3fc] sm:$0xf]
      %v536 = vld [vmem:[%s1] sm:$0xf]
      %v537 = vld [vmem:[%s1 + $0x4] sm:$0xf]
      %v538 = vld [vmem:[%s1 + $0x8] sm:$0xf]
      %v539 = vld [vmem:[%s1 + $0xc] sm:$0xf]
      %v540 = vld [vmem:[%s1 + $0x10] sm:$0x3]
      %v541 = vld [vmem:[%s2] sm:$0x1]
      %v543 = vperm.slane %v541, 0
      %v801 = vunpack.c.l.b16 %v280
      %v802 = vunpack.c.l.b16 %v281
      %v803 = vunpack.c.l.b16 %v282
      %v804 = vunpack.c.l.b16 %v283
      %v805 = vunpack.c.l.b16 %v284
      %v806 = vunpack.c.l.b16 %v285
      %v807 = vunpack.c.l.b16 %v286
      %v808 = vunpack.c.l.b16 %v287
      %v809 = vunpack.c.l.b16 %v288
      %v810 = vunpack.c.l.b16 %v289
      %v811 = vunpack.c.l.b16 %v290
      %v812 = vunpack.c.l.b16 %v291
      %v813 = vunpack.c.l.b16 %v292
      %v814 = vunpack.c.l.b16 %v293
      %v815 = vunpack.c.l.b16 %v294
      %v816 = vunpack.c.l.b16 %v295
      %v817 = vunpack.c.l.b16 %v296
      %v818 = vunpack.c.l.b16 %v297
      %v819 = vunpack.c.l.b16 %v298
      %v820 = vunpack.c.l.b16 %v299
      %v821 = vunpack.c.l.b16 %v300
      %v822 = vunpack.c.l.b16 %v301
      %v823 = vunpack.c.l.b16 %v302
      %v824 = vunpack.c.l.b16 %v303
      %v825 = vunpack.c.l.b16 %v304
      %v826 = vunpack.c.l.b16 %v305
      %v827 = vunpack.c.l.b16 %v306
      %v828 = vunpack.c.l.b16 %v307
      %v829 = vunpack.c.l.b16 %v308
      %v830 = vunpack.c.l.b16 %v309
      %v831 = vunpack.c.l.b16 %v310
      %v832 = vunpack.c.l.b16 %v311
      %v833 = vunpack.c.l.b16 %v312
      %v834 = vunpack.c.l.b16 %v313
      %v835 = vunpack.c.l.b16 %v314
      %v836 = vunpack.c.l.b16 %v315
      %v837 = vunpack.c.l.b16 %v316
      %v838 = vunpack.c.l.b16 %v317
      %v839 = vunpack.c.l.b16 %v318
      %v840 = vunpack.c.l.b16 %v319
      %v841 = vunpack.c.l.b16 %v320
      %v842 = vunpack.c.l.b16 %v321
      %v843 = vunpack.c.l.b16 %v322
      %v844 = vunpack.c.l.b16 %v323
      %v845 = vunpack.c.l.b16 %v324
      %v846 = vunpack.c.l.b16 %v325
      %v847 = vunpack.c.l.b16 %v326
      %v848 = vunpack.c.l.b16 %v327
      %v849 = vunpack.c.l.b16 %v328
      %v850 = vunpack.c.l.b16 %v329
      %v851 = vunpack.c.l.b16 %v330
      %v852 = vunpack.c.l.b16 %v331
      %v853 = vunpack.c.l.b16 %v332
      %v854 = vunpack.c.l.b16 %v333
      %v855 = vunpack.c.l.b16 %v334
      %v856 = vunpack.c.l.b16 %v335
      %v857 = vunpack.c.l.b16 %v336
      %v858 = vunpack.c.l.b16 %v337
      %v859 = vunpack.c.l.b16 %v338
      %v860 = vunpack.c.l.b16 %v339
      %v861 = vunpack.c.l.b16 %v340
      %v862 = vunpack.c.l.b16 %v341
      %v863 = vunpack.c.l.b16 %v342
      %v864 = vunpack.c.l.b16 %v343
      %v865 = vunpack.c.l.b16 %v344
      %v866 = vunpack.c.l.b16 %v345
      %v867 = vunpack.c.l.b16 %v346
      %v868 = vunpack.c.l.b16 %v347
      %v869 = vunpack.c.l.b16 %v348
      %v870 = vunpack.c.l.b16 %v349
      %v871 = vunpack.c.l.b16 %v350
      %v872 = vunpack.c.l.b16 %v351
      %v873 = vunpack.c.l.b16 %v352
      %v874 = vunpack.c.l.b16 %v353
      %v875 = vunpack.c.l.b16 %v354
      %v876 = vunpack.c.l.b16 %v355
      %v877 = vunpack.c.l.b16 %v356
      %v878 = vunpack.c.l.b16 %v357
      %v879 = vunpack.c.l.b16 %v358
      %v880 = vunpack.c.l.b16 %v359
      %v881 = vunpack.c.l.b16 %v360
      %v882 = vunpack.c.l.b16 %v361
      %v883 = vunpack.c.l.b16 %v362
      %v884 = vunpack.c.l.b16 %v363
      %v885 = vunpack.c.l.b16 %v364
      %v886 = vunpack.c.l.b16 %v365
      %v887 = vunpack.c.l.b16 %v366
      %v888 = vunpack.c.l.b16 %v367
      %v889 = vunpack.c.l.b16 %v368
      %v890 = vunpack.c.l.b16 %v369
      %v891 = vunpack.c.l.b16 %v370
      %v892 = vunpack.c.l.b16 %v371
      %v893 = vunpack.c.l.b16 %v372
      %v894 = vunpack.c.l.b16 %v373
      %v895 = vunpack.c.l.b16 %v374
      %v896 = vunpack.c.l.b16 %v375
      %v897 = vunpack.c.l.b16 %v376
      %v898 = vunpack.c.l.b16 %v377
      %v899 = vunpack.c.l.b16 %v378
      %v900 = vunpack.c.l.b16 %v379
      %v901 = vunpack.c.l.b16 %v380
      %v902 = vunpack.c.l.b16 %v381
      %v903 = vunpack.c.l.b16 %v382
      %v904 = vunpack.c.l.b16 %v383
      %v905 = vunpack.c.l.b16 %v384
      %v906 = vunpack.c.l.b16 %v385
      %v907 = vunpack.c.l.b16 %v386
      %v908 = vunpack.c.l.b16 %v387
      %v909 = vunpack.c.l.b16 %v388
      %v910 = vunpack.c.l.b16 %v389
      %v911 = vunpack.c.l.b16 %v390
      %v912 = vunpack.c.l.b16 %v391
      %v913 = vunpack.c.l.b16 %v392
      %v914 = vunpack.c.l.b16 %v393
      %v915 = vunpack.c.l.b16 %v394
      %v916 = vunpack.c.l.b16 %v395
      %v917 = vunpack.c.l.b16 %v396
      %v918 = vunpack.c.l.b16 %v397
      %v919 = vunpack.c.l.b16 %v398
      %v920 = vunpack.c.l.b16 %v399
      %v921 = vunpack.c.l.b16 %v400
      %v922 = vunpack.c.l.b16 %v401
      %v923 = vunpack.c.l.b16 %v402
      %v924 = vunpack.c.l.b16 %v403
      %v925 = vunpack.c.l.b16 %v404
      %v926 = vunpack.c.l.b16 %v405
      %v927 = vunpack.c.l.b16 %v406
      %v928 = vunpack.c.l.b16 %v407
      %v929 = vunpack.c.l.b16 %v408
      %v930 = vunpack.c.l.b16 %v409
      %v931 = vunpack.c.l.b16 %v410
      %v932 = vunpack.c.l.b16 %v411
      %v933 = vunpack.c.l.b16 %v412
      %v934 = vunpack.c.l.b16 %v413
      %v935 = vunpack.c.l.b16 %v414
      %v936 = vunpack.c.l.b16 %v415
      %v937 = vunpack.c.l.b16 %v416
      %v938 = vunpack.c.l.b16 %v417
      %v939 = vunpack.c.l.b16 %v418
      %v940 = vunpack.c.l.b16 %v419
      %v941 = vunpack.c.l.b16 %v420
      %v942 = vunpack.c.l.b16 %v421
      %v943 = vunpack.c.l.b16 %v422
      %v944 = vunpack.c.l.b16 %v423
      %v945 = vunpack.c.l.b16 %v424
      %v946 = vunpack.c.l.b16 %v425
      %v947 = vunpack.c.l.b16 %v426
      %v948 = vunpack.c.l.b16 %v427
      %v949 = vunpack.c.l.b16 %v428
      %v950 = vunpack.c.l.b16 %v429
      %v951 = vunpack.c.l.b16 %v430
      %v952 = vunpack.c.l.b16 %v431
      %v953 = vunpack.c.l.b16 %v432
      %v954 = vunpack.c.l.b16 %v433
      %v955 = vunpack.c.l.b16 %v434
      %v956 = vunpack.c.l.b16 %v435
      %v957 = vunpack.c.l.b16 %v436
      %v958 = vunpack.c.l.b16 %v437
      %v959 = vunpack.c.l.b16 %v438
      %v960 = vunpack.c.l.b16 %v439
      %v961 = vunpack.c.l.b16 %v440
      %v962 = vunpack.c.l.b16 %v441
      %v963 = vunpack.c.l.b16 %v442
      %v964 = vunpack.c.l.b16 %v443
      %v965 = vunpack.c.l.b16 %v444
      %v966 = vunpack.c.l.b16 %v445
      %v967 = vunpack.c.l.b16 %v446
      %v968 = vunpack.c.l.b16 %v447
      %v969 = vunpack.c.l.b16 %v448
      %v970 = vunpack.c.l.b16 %v449
      %v971 = vunpack.c.l.b16 %v450
      %v972 = vunpack.c.l.b16 %v451
      %v973 = vunpack.c.l.b16 %v452
      %v974 = vunpack.c.l.b16 %v453
      %v975 = vunpack.c.l.b16 %v454
      %v976 = vunpack.c.l.b16 %v455
      %v977 = vunpack.c.l.b16 %v456
      %v978 = vunpack.c.l.b16 %v457
      %v979 = vunpack.c.l.b16 %v458
      %v980 = vunpack.c.l.b16 %v459
      %v981 = vunpack.c.l.b16 %v460
      %v982 = vunpack.c.l.b16 %v461
      %v983 = vunpack.c.l.b16 %v462
      %v984 = vunpack.c.l.b16 %v463
      %v985 = vunpack.c.l.b16 %v464
      %v986 = vunpack.c.l.b16 %v465
      %v987 = vunpack.c.l.b16 %v466
      %v988 = vunpack.c.l.b16 %v467
      %v989 = vunpack.c.l.b16 %v468
      %v990 = vunpack.c.l.b16 %v469
      %v991 = vunpack.c.l.b16 %v470
      %v992 = vunpack.c.l.b16 %v471
      %v993 = vunpack.c.l.b16 %v472
      %v994 = vunpack.c.l.b16 %v473
      %v995 = vunpack.c.l.b16 %v474
      %v996 = vunpack.c.l.b16 %v475
      %v997 = vunpack.c.l.b16 %v476
      %v998 = vunpack.c.l.b16 %v477
      %v999 = vunpack.c.l.b16 %v478
      %v1000 = vunpack.c.l.b16 %v479
      %v1001 = vunpack.c.l.b16 %v480
      %v1002 = vunpack.c.l.b16 %v481
      %v1003 = vunpack.c.l.b16 %v482
      %v1004 = vunpack.c.l.b16 %v483
      %v1005 = vunpack.c.l.b16 %v484
      %v1006 = vunpack.c.l.b16 %v485
      %v1007 = vunpack.c.l.b16 %v486
      %v1008 = vunpack.c.l.b16 %v487
      %v1009 = vunpack.c.l.b16 %v488
      %v1010 = vunpack.c.l.b16 %v489
      %v1011 = vunpack.c.l.b16 %v490
      %v1012 = vunpack.c.l.b16 %v491
      %v1013 = vunpack.c.l.b16 %v492
      %v1014 = vunpack.c.l.b16 %v493
      %v1015 = vunpack.c.l.b16 %v494
      %v1016 = vunpack.c.l.b16 %v495
      %v1017 = vunpack.c.l.b16 %v496
      %v1018 = vunpack.c.l.b16 %v497
      %v1019 = vunpack.c.l.b16 %v498
      %v1020 = vunpack.c.l.b16 %v499
      %v1021 = vunpack.c.l.b16 %v500
      %v1022 = vunpack.c.l.b16 %v501
      %v1023 = vunpack.c.l.b16 %v502
      %v1024 = vunpack.c.l.b16 %v503
      %v1025 = vunpack.c.l.b16 %v504
      %v1026 = vunpack.c.l.b16 %v505
      %v1027 = vunpack.c.l.b16 %v506
      %v1028 = vunpack.c.l.b16 %v507
      %v1029 = vunpack.c.l.b16 %v508
      %v1030 = vunpack.c.l.b16 %v509
      %v1031 = vunpack.c.l.b16 %v510
      %v1032 = vunpack.c.l.b16 %v511
      %v1033 = vunpack.c.l.b16 %v512
      %v1034 = vunpack.c.l.b16 %v513
      %v1035 = vunpack.c.l.b16 %v514
      %v1036 = vunpack.c.l.b16 %v515
      %v1037 = vunpack.c.l.b16 %v516
      %v1038 = vunpack.c.l.b16 %v517
      %v1039 = vunpack.c.l.b16 %v518
      %v1040 = vunpack.c.l.b16 %v519
      %v1041 = vunpack.c.l.b16 %v520
      %v1042 = vunpack.c.l.b16 %v521
      %v1043 = vunpack.c.l.b16 %v522
      %v1044 = vunpack.c.l.b16 %v523
      %v1045 = vunpack.c.l.b16 %v524
      %v1046 = vunpack.c.l.b16 %v525
      %v1047 = vunpack.c.l.b16 %v526
      %v1048 = vunpack.c.l.b16 %v527
      %v1049 = vunpack.c.l.b16 %v528
      %v1050 = vunpack.c.l.b16 %v529
      %v1051 = vunpack.c.l.b16 %v530
      %v1052 = vunpack.c.l.b16 %v531
      %v1053 = vunpack.c.l.b16 %v532
      %v1054 = vunpack.c.l.b16 %v533
      %v1055 = vunpack.c.l.b16 %v534
      %v1056 = vunpack.c.l.b16 %v535
      %v1057 = vpack.c.b16 %v802, %v801
      %v1058 = vpack.c.b16 %v804, %v803
      %v1059 = vpack.c.b16 %v806, %v805
      %v1060 = vpack.c.b16 %v808, %v807
      %v1061 = vpack.c.b16 %v810, %v809
      %v1062 = vpack.c.b16 %v812, %v811
      %v1063 = vpack.c.b16 %v814, %v813
      %v1064 = vpack.c.b16 %v816, %v815
      %v1065 = vpack.c.b16 %v818, %v817
      %v1066 = vpack.c.b16 %v820, %v819
      %v1067 = vpack.c.b16 %v822, %v821
      %v1068 = vpack.c.b16 %v824, %v823
      %v1069 = vpack.c.b16 %v826, %v825
      %v1070 = vpack.c.b16 %v828, %v827
      %v1071 = vpack.c.b16 %v830, %v829
      %v1072 = vpack.c.b16 %v832, %v831
      %v1073 = vpack.c.b16 %v834, %v833
      %v1074 = vpack.c.b16 %v836, %v835
      %v1075 = vpack.c.b16 %v838, %v837
      %v1076 = vpack.c.b16 %v840, %v839
      %v1077 = vpack.c.b16 %v842, %v841
      %v1078 = vpack.c.b16 %v844, %v843
      %v1079 = vpack.c.b16 %v846, %v845
      %v1080 = vpack.c.b16 %v848, %v847
      %v1081 = vpack.c.b16 %v850, %v849
      %v1082 = vpack.c.b16 %v852, %v851
      %v1083 = vpack.c.b16 %v854, %v853
      %v1084 = vpack.c.b16 %v856, %v855
      %v1085 = vpack.c.b16 %v858, %v857
      %v1086 = vpack.c.b16 %v860, %v859
      %v1087 = vpack.c.b16 %v862, %v861
      %v1088 = vpack.c.b16 %v864, %v863
      %v1089 = vpack.c.b16 %v866, %v865
      %v1090 = vpack.c.b16 %v868, %v867
      %v1091 = vpack.c.b16 %v870, %v869
      %v1092 = vpack.c.b16 %v872, %v871
      %v1093 = vpack.c.b16 %v874, %v873
      %v1094 = vpack.c.b16 %v876, %v875
      %v1095 = vpack.c.b16 %v878, %v877
      %v1096 = vpack.c.b16 %v880, %v879
      %v1097 = vpack.c.b16 %v882, %v881
      %v1098 = vpack.c.b16 %v884, %v883
      %v1099 = vpack.c.b16 %v886, %v885
      %v1100 = vpack.c.b16 %v888, %v887
      %v1101 = vpack.c.b16 %v890, %v889
      %v1102 = vpack.c.b16 %v892, %v891
      %v1103 = vpack.c.b16 %v894, %v893
      %v1104 = vpack.c.b16 %v896, %v895
      %v1105 = vpack.c.b16 %v898, %v897
      %v1106 = vpack.c.b16 %v900, %v899
      %v1107 = vpack.c.b16 %v902, %v901
      %v1108 = vpack.c.b16 %v904, %v903
      %v1109 = vpack.c.b16 %v906, %v905
      %v1110 = vpack.c.b16 %v908, %v907
      %v1111 = vpack.c.b16 %v910, %v909
      %v1112 = vpack.c.b16 %v912, %v911
      %v1113 = vpack.c.b16 %v914, %v913
      %v1114 = vpack.c.b16 %v916, %v915
      %v1115 = vpack.c.b16 %v918, %v917
      %v1116 = vpack.c.b16 %v920, %v919
      %v1117 = vpack.c.b16 %v922, %v921
      %v1118 = vpack.c.b16 %v924, %v923
      %v1119 = vpack.c.b16 %v926, %v925
      %v1120 = vpack.c.b16 %v928, %v927
      %v1121 = vpack.c.b16 %v930, %v929
      %v1122 = vpack.c.b16 %v932, %v931
      %v1123 = vpack.c.b16 %v934, %v933
      %v1124 = vpack.c.b16 %v936, %v935
      %v1125 = vpack.c.b16 %v938, %v937
      %v1126 = vpack.c.b16 %v940, %v939
      %v1127 = vpack.c.b16 %v942, %v941
      %v1128 = vpack.c.b16 %v944, %v943
      %v1129 = vpack.c.b16 %v946, %v945
      %v1130 = vpack.c.b16 %v948, %v947
      %v1131 = vpack.c.b16 %v950, %v949
      %v1132 = vpack.c.b16 %v952, %v951
      %v1133 = vpack.c.b16 %v954, %v953
      %v1134 = vpack.c.b16 %v956, %v955
      %v1135 = vpack.c.b16 %v958, %v957
      %v1136 = vpack.c.b16 %v960, %v959
      %v1137 = vpack.c.b16 %v962, %v961
      %v1138 = vpack.c.b16 %v964, %v963
      %v1139 = vpack.c.b16 %v966, %v965
      %v1140 = vpack.c.b16 %v968, %v967
      %v1141 = vpack.c.b16 %v970, %v969
      %v1142 = vpack.c.b16 %v972, %v971
      %v1143 = vpack.c.b16 %v974, %v973
      %v1144 = vpack.c.b16 %v976, %v975
      %v1145 = vpack.c.b16 %v978, %v977
      %v1146 = vpack.c.b16 %v980, %v979
      %v1147 = vpack.c.b16 %v982, %v981
      %v1148 = vpack.c.b16 %v984, %v983
      %v1149 = vpack.c.b16 %v986, %v985
      %v1150 = vpack.c.b16 %v988, %v987
      %v1151 = vpack.c.b16 %v990, %v989
      %v1152 = vpack.c.b16 %v992, %v991
      %v1153 = vpack.c.b16 %v994, %v993
      %v1154 = vpack.c.b16 %v996, %v995
      %v1155 = vpack.c.b16 %v998, %v997
      %v1156 = vpack.c.b16 %v1000, %v999
      %v1157 = vpack.c.b16 %v1002, %v1001
      %v1158 = vpack.c.b16 %v1004, %v1003
      %v1159 = vpack.c.b16 %v1006, %v1005
      %v1160 = vpack.c.b16 %v1008, %v1007
      %v1161 = vpack.c.b16 %v1010, %v1009
      %v1162 = vpack.c.b16 %v1012, %v1011
      %v1163 = vpack.c.b16 %v1014, %v1013
      %v1164 = vpack.c.b16 %v1016, %v1015
      %v1165 = vpack.c.b16 %v1018, %v1017
      %v1166 = vpack.c.b16 %v1020, %v1019
      %v1167 = vpack.c.b16 %v1022, %v1021
      %v1168 = vpack.c.b16 %v1024, %v1023
      %v1169 = vpack.c.b16 %v1026, %v1025
      %v1170 = vpack.c.b16 %v1028, %v1027
      %v1171 = vpack.c.b16 %v1030, %v1029
      %v1172 = vpack.c.b16 %v1032, %v1031
      %v1173 = vpack.c.b16 %v1034, %v1033
      %v1174 = vpack.c.b16 %v1036, %v1035
      %v1175 = vpack.c.b16 %v1038, %v1037
      %v1176 = vpack.c.b16 %v1040, %v1039
      %v1177 = vpack.c.b16 %v1042, %v1041
      %v1178 = vpack.c.b16 %v1044, %v1043
      %v1179 = vpack.c.b16 %v1046, %v1045
      %v1180 = vpack.c.b16 %v1048, %v1047
      %v1181 = vpack.c.b16 %v1050, %v1049
      %v1182 = vpack.c.b16 %v1052, %v1051
      %v1183 = vpack.c.b16 %v1054, %v1053
      %v1184 = vpack.c.b16 %v1056, %v1055
      %v1190 = vunpack.c.l.b16 %v536
      %v1191 = vunpack.c.l.b16 %v537
      %v1192 = vunpack.c.l.b16 %v538
      %v1193 = vunpack.c.l.b16 %v539
      %v1194 = vunpack.c.l.b16 %v540
      %v1195 = vpack.c.b16 %v1191, %v1190
      %v1196 = vpack.c.b16 %v1193, %v1192
      %v1197 = vpack.c.b16 %v1194, %v1194
      %vm1200 = vcmask 293888
      %v1202 = vsel %vm1200, %v1057, 0
      %v1205 = vsel %vm1200, %v1058, 0
      %v1208 = vsel %vm1200, %v1059, 0
      %v1211 = vsel %vm1200, %v1060, 0
      %v1214 = vsel %vm1200, %v1061, 0
      %v1217 = vsel %vm1200, %v1062, 0
      %v1220 = vsel %vm1200, %v1063, 0
      %v1223 = vsel %vm1200, %v1064, 0
      %v1226 = vsel %vm1200, %v1065, 0
      %v1229 = vsel %vm1200, %v1066, 0
      %v1232 = vsel %vm1200, %v1067, 0
      %v1235 = vsel %vm1200, %v1068, 0
      %v1238 = vsel %vm1200, %v1069, 0
      %v1241 = vsel %vm1200, %v1070, 0
      %v1244 = vsel %vm1200, %v1071, 0
      %v1247 = vsel %vm1200, %v1072, 0
      %v1250 = vsel %vm1200, %v1073, 0
      %v1253 = vsel %vm1200, %v1074, 0
      %v1256 = vsel %vm1200, %v1075, 0
      %v1259 = vsel %vm1200, %v1076, 0
      %v1262 = vsel %vm1200, %v1077, 0
      %v1265 = vsel %vm1200, %v1078, 0
      %v1268 = vsel %vm1200, %v1079, 0
      %v1271 = vsel %vm1200, %v1080, 0
      %v1274 = vsel %vm1200, %v1081, 0
      %v1277 = vsel %vm1200, %v1082, 0
      %v1280 = vsel %vm1200, %v1083, 0
      %v1283 = vsel %vm1200, %v1084, 0
      %v1286 = vsel %vm1200, %v1085, 0
      %v1289 = vsel %vm1200, %v1086, 0
      %v1292 = vsel %vm1200, %v1087, 0
      %v1295 = vsel %vm1200, %v1088, 0
      %v1298 = vsel %vm1200, %v1089, 0
      %v1301 = vsel %vm1200, %v1090, 0
      %v1304 = vsel %vm1200, %v1091, 0
      %v1307 = vsel %vm1200, %v1092, 0
      %v1310 = vsel %vm1200, %v1093, 0
      %v1313 = vsel %vm1200, %v1094, 0
      %v1316 = vsel %vm1200, %v1095, 0
      %v1319 = vsel %vm1200, %v1096, 0
      %v1322 = vsel %vm1200, %v1097, 0
      %v1325 = vsel %vm1200, %v1098, 0
      %v1328 = vsel %vm1200, %v1099, 0
      %v1331 = vsel %vm1200, %v1100, 0
      %v1334 = vsel %vm1200, %v1101, 0
      %v1337 = vsel %vm1200, %v1102, 0
      %v1340 = vsel %vm1200, %v1103, 0
      %v1343 = vsel %vm1200, %v1104, 0
      %v1346 = vsel %vm1200, %v1105, 0
      %v1349 = vsel %vm1200, %v1106, 0
      %v1352 = vsel %vm1200, %v1107, 0
      %v1355 = vsel %vm1200, %v1108, 0
      %v1358 = vsel %vm1200, %v1109, 0
      %v1361 = vsel %vm1200, %v1110, 0
      %v1364 = vsel %vm1200, %v1111, 0
      %v1367 = vsel %vm1200, %v1112, 0
      %v1370 = vsel %vm1200, %v1113, 0
      %v1373 = vsel %vm1200, %v1114, 0
      %v1376 = vsel %vm1200, %v1115, 0
      %v1379 = vsel %vm1200, %v1116, 0
      %v1382 = vsel %vm1200, %v1117, 0
      %v1385 = vsel %vm1200, %v1118, 0
      %v1388 = vsel %vm1200, %v1119, 0
      %v1391 = vsel %vm1200, %v1120, 0
      %v1394 = vsel %vm1200, %v1121, 0
      %v1397 = vsel %vm1200, %v1122, 0
      %v1400 = vsel %vm1200, %v1123, 0
      %v1403 = vsel %vm1200, %v1124, 0
      %v1406 = vsel %vm1200, %v1125, 0
      %v1409 = vsel %vm1200, %v1126, 0
      %v1412 = vsel %vm1200, %v1127, 0
      %v1415 = vsel %vm1200, %v1128, 0
      %v1418 = vsel %vm1200, %v1129, 0
      %v1421 = vsel %vm1200, %v1130, 0
      %v1424 = vsel %vm1200, %v1131, 0
      %v1427 = vsel %vm1200, %v1132, 0
      %v1430 = vsel %vm1200, %v1133, 0
      %v1433 = vsel %vm1200, %v1134, 0
      %v1436 = vsel %vm1200, %v1135, 0
      %v1439 = vsel %vm1200, %v1136, 0
      %v1442 = vsel %vm1200, %v1137, 0
      %v1445 = vsel %vm1200, %v1138, 0
      %v1448 = vsel %vm1200, %v1139, 0
      %v1451 = vsel %vm1200, %v1140, 0
      %v1454 = vsel %vm1200, %v1141, 0
      %v1457 = vsel %vm1200, %v1142, 0
      %v1460 = vsel %vm1200, %v1143, 0
      %v1463 = vsel %vm1200, %v1144, 0
      %v1466 = vsel %vm1200, %v1145, 0
      %v1469 = vsel %vm1200, %v1146, 0
      %v1472 = vsel %vm1200, %v1147, 0
      %v1475 = vsel %vm1200, %v1148, 0
      %v1478 = vsel %vm1200, %v1149, 0
      %v1481 = vsel %vm1200, %v1150, 0
      %v1484 = vsel %vm1200, %v1151, 0
      %v1487 = vsel %vm1200, %v1152, 0
      %v1490 = vsel %vm1200, %v1153, 0
      %v1493 = vsel %vm1200, %v1154, 0
      %v1496 = vsel %vm1200, %v1155, 0
      %v1499 = vsel %vm1200, %v1156, 0
      %v1502 = vsel %vm1200, %v1157, 0
      %v1505 = vsel %vm1200, %v1158, 0
      %v1508 = vsel %vm1200, %v1159, 0
      %v1511 = vsel %vm1200, %v1160, 0
      %v1514 = vsel %vm1200, %v1161, 0
      %v1517 = vsel %vm1200, %v1162, 0
      %v1520 = vsel %vm1200, %v1163, 0
      %v1523 = vsel %vm1200, %v1164, 0
      %v1526 = vsel %vm1200, %v1165, 0
      %v1529 = vsel %vm1200, %v1166, 0
      %v1532 = vsel %vm1200, %v1167, 0
      %v1535 = vsel %vm1200, %v1168, 0
      %v1538 = vsel %vm1200, %v1169, 0
      %v1541 = vsel %vm1200, %v1170, 0
      %v1544 = vsel %vm1200, %v1171, 0
      %v1547 = vsel %vm1200, %v1172, 0
      %v1550 = vsel %vm1200, %v1173, 0
      %v1553 = vsel %vm1200, %v1174, 0
      %v1556 = vsel %vm1200, %v1175, 0
      %v1559 = vsel %vm1200, %v1176, 0
      %v1562 = vsel %vm1200, %v1177, 0
      %v1565 = vsel %vm1200, %v1178, 0
      %v1568 = vsel %vm1200, %v1179, 0
      %v1571 = vsel %vm1200, %v1180, 0
      %v1574 = vsel %vm1200, %v1181, 0
      %v1577 = vsel %vm1200, %v1182, 0
      %v1580 = vsel %vm1200, %v1183, 0
      %v1583 = vsel %vm1200, %v1184, 0
      %vm1585 = vcmask 1041408
      %v1587 = vsel %vm1585, %v1197, 0
      %1589 = vmatpush.bf16.msra.mxu0 0
      %1590 = vmatpush.bf16.msra.mxu0 0
      %1591 = vmatpush.bf16.msra.mxu0 0
      %1592 = vmatpush.bf16.msra.mxu0 0
      %1593 = vmatpush.bf16.msra.mxu0 0
      %1594 = vmatpush.bf16.msra.mxu0 %v1587
      %1595 = vmatpush.bf16.msra.mxu0 %v1196
      %1596 = vmatpush.bf16.msra.mxu0 %v1195
      %1597 = vmatmul.bf16.gmra.mxu0 %v1202
      %v1598 = vpop.f32.mrf.mxu0
      %v1599 = vadd.f32 %v543, %v1598
      %v1600 = vpop.f32.mrf.mxu0
      %v1601 = vadd.f32 %v543, %v1600
      %1602 = vmatmul.bf16.gmra.mxu0 %v1205
      %v1603 = vpop.f32.mrf.mxu0
      %v1604 = vadd.f32 %v543, %v1603
      %v1605 = vpop.f32.mrf.mxu0
      %v1606 = vadd.f32 %v543, %v1605
      %1607 = vmatmul.bf16.gmra.mxu0 %v1208
      %v1608 = vpop.f32.mrf.mxu0
      %v1609 = vadd.f32 %v543, %v1608
      %v1610 = vpop.f32.mrf.mxu0
      %v1611 = vadd.f32 %v543, %v1610
      %1612 = vmatmul.bf16.gmra.mxu0 %v1211
      %v1613 = vpop.f32.mrf.mxu0
      %v1614 = vadd.f32 %v543, %v1613
      %v1615 = vpop.f32.mrf.mxu0
      %v1616 = vadd.f32 %v543, %v1615
      %1617 = vmatmul.bf16.gmra.mxu0 %v1214
      %v1618 = vpop.f32.mrf.mxu0
      %v1619 = vadd.f32 %v543, %v1618
      %v1620 = vpop.f32.mrf.mxu0
      %v1621 = vadd.f32 %v543, %v1620
      %1622 = vmatmul.bf16.gmra.mxu0 %v1217
      %v1623 = vpop.f32.mrf.mxu0
      %v1624 = vadd.f32 %v543, %v1623
      %v1625 = vpop.f32.mrf.mxu0
      %v1626 = vadd.f32 %v543, %v1625
      %1627 = vmatmul.bf16.gmra.mxu0 %v1220
      %v1628 = vpop.f32.mrf.mxu0
      %v1629 = vadd.f32 %v543, %v1628
      %v1630 = vpop.f32.mrf.mxu0
      %v1631 = vadd.f32 %v543, %v1630
      %1632 = vmatmul.bf16.gmra.mxu0 %v1223
      %v1633 = vpop.f32.mrf.mxu0
      %v1634 = vadd.f32 %v543, %v1633
      %v1635 = vpop.f32.mrf.mxu0
      %v1636 = vadd.f32 %v543, %v1635
      %1637 = vmatmul.bf16.gmra.mxu0 %v1226
      %v1638 = vpop.f32.mrf.mxu0
      %v1639 = vadd.f32 %v543, %v1638
      %v1640 = vpop.f32.mrf.mxu0
      %v1641 = vadd.f32 %v543, %v1640
      %1642 = vmatmul.bf16.gmra.mxu0 %v1229
      %v1643 = vpop.f32.mrf.mxu0
      %v1644 = vadd.f32 %v543, %v1643
      %v1645 = vpop.f32.mrf.mxu0
      %v1646 = vadd.f32 %v543, %v1645
      %1647 = vmatmul.bf16.gmra.mxu0 %v1232
      %v1648 = vpop.f32.mrf.mxu0
      %v1649 = vadd.f32 %v543, %v1648
      %v1650 = vpop.f32.mrf.mxu0
      %v1651 = vadd.f32 %v543, %v1650
      %1652 = vmatmul.bf16.gmra.mxu0 %v1235
      %v1653 = vpop.f32.mrf.mxu0
      %v1654 = vadd.f32 %v543, %v1653
      %v1655 = vpop.f32.mrf.mxu0
      %v1656 = vadd.f32 %v543, %v1655
      %1657 = vmatmul.bf16.gmra.mxu0 %v1238
      %v1658 = vpop.f32.mrf.mxu0
      %v1659 = vadd.f32 %v543, %v1658
      %v1660 = vpop.f32.mrf.mxu0
      %v1661 = vadd.f32 %v543, %v1660
      %1662 = vmatmul.bf16.gmra.mxu0 %v1241
      %v1663 = vpop.f32.mrf.mxu0
      %v1664 = vadd.f32 %v543, %v1663
      %v1665 = vpop.f32.mrf.mxu0
      %v1666 = vadd.f32 %v543, %v1665
      %1667 = vmatmul.bf16.gmra.mxu0 %v1244
      %v1668 = vpop.f32.mrf.mxu0
      %v1669 = vadd.f32 %v543, %v1668
      %v1670 = vpop.f32.mrf.mxu0
      %v1671 = vadd.f32 %v543, %v1670
      %1672 = vmatmul.bf16.gmra.mxu0 %v1247
      %v1673 = vpop.f32.mrf.mxu0
      %v1674 = vadd.f32 %v543, %v1673
      %v1675 = vpop.f32.mrf.mxu0
      %v1676 = vadd.f32 %v543, %v1675
      %1677 = vmatmul.bf16.gmra.mxu0 %v1250
      %v1678 = vpop.f32.mrf.mxu0
      %v1679 = vadd.f32 %v543, %v1678
      %v1680 = vpop.f32.mrf.mxu0
      %v1681 = vadd.f32 %v543, %v1680
      %1682 = vmatmul.bf16.gmra.mxu0 %v1253
      %v1683 = vpop.f32.mrf.mxu0
      %v1684 = vadd.f32 %v543, %v1683
      %v1685 = vpop.f32.mrf.mxu0
      %v1686 = vadd.f32 %v543, %v1685
      %1687 = vmatmul.bf16.gmra.mxu0 %v1256
      %v1688 = vpop.f32.mrf.mxu0
      %v1689 = vadd.f32 %v543, %v1688
      %v1690 = vpop.f32.mrf.mxu0
      %v1691 = vadd.f32 %v543, %v1690
      %1692 = vmatmul.bf16.gmra.mxu0 %v1259
      %v1693 = vpop.f32.mrf.mxu0
      %v1694 = vadd.f32 %v543, %v1693
      %v1695 = vpop.f32.mrf.mxu0
      %v1696 = vadd.f32 %v543, %v1695
      %1697 = vmatmul.bf16.gmra.mxu0 %v1262
      %v1698 = vpop.f32.mrf.mxu0
      %v1699 = vadd.f32 %v543, %v1698
      %v1700 = vpop.f32.mrf.mxu0
      %v1701 = vadd.f32 %v543, %v1700
      %1702 = vmatmul.bf16.gmra.mxu0 %v1265
      %v1703 = vpop.f32.mrf.mxu0
      %v1704 = vadd.f32 %v543, %v1703
      %v1705 = vpop.f32.mrf.mxu0
      %v1706 = vadd.f32 %v543, %v1705
      %1707 = vmatmul.bf16.gmra.mxu0 %v1268
      %v1708 = vpop.f32.mrf.mxu0
      %v1709 = vadd.f32 %v543, %v1708
      %v1710 = vpop.f32.mrf.mxu0
      %v1711 = vadd.f32 %v543, %v1710
      %1712 = vmatmul.bf16.gmra.mxu0 %v1271
      %v1713 = vpop.f32.mrf.mxu0
      %v1714 = vadd.f32 %v543, %v1713
      %v1715 = vpop.f32.mrf.mxu0
      %v1716 = vadd.f32 %v543, %v1715
      %1717 = vmatmul.bf16.gmra.mxu0 %v1274
      %v1718 = vpop.f32.mrf.mxu0
      %v1719 = vadd.f32 %v543, %v1718
      %v1720 = vpop.f32.mrf.mxu0
      %v1721 = vadd.f32 %v543, %v1720
      %1722 = vmatmul.bf16.gmra.mxu0 %v1277
      %v1723 = vpop.f32.mrf.mxu0
      %v1724 = vadd.f32 %v543, %v1723
      %v1725 = vpop.f32.mrf.mxu0
      %v1726 = vadd.f32 %v543, %v1725
      %1727 = vmatmul.bf16.gmra.mxu0 %v1280
      %v1728 = vpop.f32.mrf.mxu0
      %v1729 = vadd.f32 %v543, %v1728
      %v1730 = vpop.f32.mrf.mxu0
      %v1731 = vadd.f32 %v543, %v1730
      %1732 = vmatmul.bf16.gmra.mxu0 %v1283
      %v1733 = vpop.f32.mrf.mxu0
      %v1734 = vadd.f32 %v543, %v1733
      %v1735 = vpop.f32.mrf.mxu0
      %v1736 = vadd.f32 %v543, %v1735
      %1737 = vmatmul.bf16.gmra.mxu0 %v1286
      %v1738 = vpop.f32.mrf.mxu0
      %v1739 = vadd.f32 %v543, %v1738
      %v1740 = vpop.f32.mrf.mxu0
      %v1741 = vadd.f32 %v543, %v1740
      %1742 = vmatmul.bf16.gmra.mxu0 %v1289
      %v1743 = vpop.f32.mrf.mxu0
      %v1744 = vadd.f32 %v543, %v1743
      %v1745 = vpop.f32.mrf.mxu0
      %v1746 = vadd.f32 %v543, %v1745
      %1747 = vmatmul.bf16.gmra.mxu0 %v1292
      %v1748 = vpop.f32.mrf.mxu0
      %v1749 = vadd.f32 %v543, %v1748
      %v1750 = vpop.f32.mrf.mxu0
      %v1751 = vadd.f32 %v543, %v1750
      %1752 = vmatmul.bf16.gmra.mxu0 %v1295
      %v1753 = vpop.f32.mrf.mxu0
      %v1754 = vadd.f32 %v543, %v1753
      %v1755 = vpop.f32.mrf.mxu0
      %v1756 = vadd.f32 %v543, %v1755
      %1757 = vmatmul.bf16.gmra.mxu0 %v1298
      %v1758 = vpop.f32.mrf.mxu0
      %v1759 = vadd.f32 %v543, %v1758
      %v1760 = vpop.f32.mrf.mxu0
      %v1761 = vadd.f32 %v543, %v1760
      %1762 = vmatmul.bf16.gmra.mxu0 %v1301
      %v1763 = vpop.f32.mrf.mxu0
      %v1764 = vadd.f32 %v543, %v1763
      %v1765 = vpop.f32.mrf.mxu0
      %v1766 = vadd.f32 %v543, %v1765
      %1767 = vmatmul.bf16.gmra.mxu0 %v1304
      %v1768 = vpop.f32.mrf.mxu0
      %v1769 = vadd.f32 %v543, %v1768
      %v1770 = vpop.f32.mrf.mxu0
      %v1771 = vadd.f32 %v543, %v1770
      %1772 = vmatmul.bf16.gmra.mxu0 %v1307
      %v1773 = vpop.f32.mrf.mxu0
      %v1774 = vadd.f32 %v543, %v1773
      %v1775 = vpop.f32.mrf.mxu0
      %v1776 = vadd.f32 %v543, %v1775
      %1777 = vmatmul.bf16.gmra.mxu0 %v1310
      %v1778 = vpop.f32.mrf.mxu0
      %v1779 = vadd.f32 %v543, %v1778
      %v1780 = vpop.f32.mrf.mxu0
      %v1781 = vadd.f32 %v543, %v1780
      %1782 = vmatmul.bf16.gmra.mxu0 %v1313
      %v1783 = vpop.f32.mrf.mxu0
      %v1784 = vadd.f32 %v543, %v1783
      %v1785 = vpop.f32.mrf.mxu0
      %v1786 = vadd.f32 %v543, %v1785
      %1787 = vmatmul.bf16.gmra.mxu0 %v1316
      %v1788 = vpop.f32.mrf.mxu0
      %v1789 = vadd.f32 %v543, %v1788
      %v1790 = vpop.f32.mrf.mxu0
      %v1791 = vadd.f32 %v543, %v1790
      %1792 = vmatmul.bf16.gmra.mxu0 %v1319
      %v1793 = vpop.f32.mrf.mxu0
      %v1794 = vadd.f32 %v543, %v1793
      %v1795 = vpop.f32.mrf.mxu0
      %v1796 = vadd.f32 %v543, %v1795
      %1797 = vmatmul.bf16.gmra.mxu0 %v1322
      %v1798 = vpop.f32.mrf.mxu0
      %v1799 = vadd.f32 %v543, %v1798
      %v1800 = vpop.f32.mrf.mxu0
      %v1801 = vadd.f32 %v543, %v1800
      %1802 = vmatmul.bf16.gmra.mxu0 %v1325
      %v1803 = vpop.f32.mrf.mxu0
      %v1804 = vadd.f32 %v543, %v1803
      %v1805 = vpop.f32.mrf.mxu0
      %v1806 = vadd.f32 %v543, %v1805
      %1807 = vmatmul.bf16.gmra.mxu0 %v1328
      %v1808 = vpop.f32.mrf.mxu0
      %v1809 = vadd.f32 %v543, %v1808
      %v1810 = vpop.f32.mrf.mxu0
      %v1811 = vadd.f32 %v543, %v1810
      %1812 = vmatmul.bf16.gmra.mxu0 %v1331
      %v1813 = vpop.f32.mrf.mxu0
      %v1814 = vadd.f32 %v543, %v1813
      %v1815 = vpop.f32.mrf.mxu0
      %v1816 = vadd.f32 %v543, %v1815
      %1817 = vmatmul.bf16.gmra.mxu0 %v1334
      %v1818 = vpop.f32.mrf.mxu0
      %v1819 = vadd.f32 %v543, %v1818
      %v1820 = vpop.f32.mrf.mxu0
      %v1821 = vadd.f32 %v543, %v1820
      %1822 = vmatmul.bf16.gmra.mxu0 %v1337
      %v1823 = vpop.f32.mrf.mxu0
      %v1824 = vadd.f32 %v543, %v1823
      %v1825 = vpop.f32.mrf.mxu0
      %v1826 = vadd.f32 %v543, %v1825
      %1827 = vmatmul.bf16.gmra.mxu0 %v1340
      %v1828 = vpop.f32.mrf.mxu0
      %v1829 = vadd.f32 %v543, %v1828
      %v1830 = vpop.f32.mrf.mxu0
      %v1831 = vadd.f32 %v543, %v1830
      %1832 = vmatmul.bf16.gmra.mxu0 %v1343
      %v1833 = vpop.f32.mrf.mxu0
      %v1834 = vadd.f32 %v543, %v1833
      %v1835 = vpop.f32.mrf.mxu0
      %v1836 = vadd.f32 %v543, %v1835
      %1837 = vmatmul.bf16.gmra.mxu0 %v1346
      %v1838 = vpop.f32.mrf.mxu0
      %v1839 = vadd.f32 %v543, %v1838
      %v1840 = vpop.f32.mrf.mxu0
      %v1841 = vadd.f32 %v543, %v1840
      %1842 = vmatmul.bf16.gmra.mxu0 %v1349
      %v1843 = vpop.f32.mrf.mxu0
      %v1844 = vadd.f32 %v543, %v1843
      %v1845 = vpop.f32.mrf.mxu0
      %v1846 = vadd.f32 %v543, %v1845
      %1847 = vmatmul.bf16.gmra.mxu0 %v1352
      %v1848 = vpop.f32.mrf.mxu0
      %v1849 = vadd.f32 %v543, %v1848
      %v1850 = vpop.f32.mrf.mxu0
      %v1851 = vadd.f32 %v543, %v1850
      %1852 = vmatmul.bf16.gmra.mxu0 %v1355
      %v1853 = vpop.f32.mrf.mxu0
      %v1854 = vadd.f32 %v543, %v1853
      %v1855 = vpop.f32.mrf.mxu0
      %v1856 = vadd.f32 %v543, %v1855
      %1857 = vmatmul.bf16.gmra.mxu0 %v1358
      %v1858 = vpop.f32.mrf.mxu0
      %v1859 = vadd.f32 %v543, %v1858
      %v1860 = vpop.f32.mrf.mxu0
      %v1861 = vadd.f32 %v543, %v1860
      %1862 = vmatmul.bf16.gmra.mxu0 %v1361
      %v1863 = vpop.f32.mrf.mxu0
      %v1864 = vadd.f32 %v543, %v1863
      %v1865 = vpop.f32.mrf.mxu0
      %v1866 = vadd.f32 %v543, %v1865
      %1867 = vmatmul.bf16.gmra.mxu0 %v1364
      %v1868 = vpop.f32.mrf.mxu0
      %v1869 = vadd.f32 %v543, %v1868
      %v1870 = vpop.f32.mrf.mxu0
      %v1871 = vadd.f32 %v543, %v1870
      %1872 = vmatmul.bf16.gmra.mxu0 %v1367
      %v1873 = vpop.f32.mrf.mxu0
      %v1874 = vadd.f32 %v543, %v1873
      %v1875 = vpop.f32.mrf.mxu0
      %v1876 = vadd.f32 %v543, %v1875
      %1877 = vmatmul.bf16.gmra.mxu0 %v1370
      %v1878 = vpop.f32.mrf.mxu0
      %v1879 = vadd.f32 %v543, %v1878
      %v1880 = vpop.f32.mrf.mxu0
      %v1881 = vadd.f32 %v543, %v1880
      %1882 = vmatmul.bf16.gmra.mxu0 %v1373
      %v1883 = vpop.f32.mrf.mxu0
      %v1884 = vadd.f32 %v543, %v1883
      %v1885 = vpop.f32.mrf.mxu0
      %v1886 = vadd.f32 %v543, %v1885
      %1887 = vmatmul.bf16.gmra.mxu0 %v1376
      %v1888 = vpop.f32.mrf.mxu0
      %v1889 = vadd.f32 %v543, %v1888
      %v1890 = vpop.f32.mrf.mxu0
      %v1891 = vadd.f32 %v543, %v1890
      %1892 = vmatmul.bf16.gmra.mxu0 %v1379
      %v1893 = vpop.f32.mrf.mxu0
      %v1894 = vadd.f32 %v543, %v1893
      %v1895 = vpop.f32.mrf.mxu0
      %v1896 = vadd.f32 %v543, %v1895
      %1897 = vmatmul.bf16.gmra.mxu0 %v1382
      %v1898 = vpop.f32.mrf.mxu0
      %v1899 = vadd.f32 %v543, %v1898
      %v1900 = vpop.f32.mrf.mxu0
      %v1901 = vadd.f32 %v543, %v1900
      %1902 = vmatmul.bf16.gmra.mxu0 %v1385
      %v1903 = vpop.f32.mrf.mxu0
      %v1904 = vadd.f32 %v543, %v1903
      %v1905 = vpop.f32.mrf.mxu0
      %v1906 = vadd.f32 %v543, %v1905
      %1907 = vmatmul.bf16.gmra.mxu0 %v1388
      %v1908 = vpop.f32.mrf.mxu0
      %v1909 = vadd.f32 %v543, %v1908
      %v1910 = vpop.f32.mrf.mxu0
      %v1911 = vadd.f32 %v543, %v1910
      %1912 = vmatmul.bf16.gmra.mxu0 %v1391
      %v1913 = vpop.f32.mrf.mxu0
      %v1914 = vadd.f32 %v543, %v1913
      %v1915 = vpop.f32.mrf.mxu0
      %v1916 = vadd.f32 %v543, %v1915
      %1917 = vmatmul.bf16.gmra.mxu0 %v1394
      %v1918 = vpop.f32.mrf.mxu0
      %v1919 = vadd.f32 %v543, %v1918
      %v1920 = vpop.f32.mrf.mxu0
      %v1921 = vadd.f32 %v543, %v1920
      %1922 = vmatmul.bf16.gmra.mxu0 %v1397
      %v1923 = vpop.f32.mrf.mxu0
      %v1924 = vadd.f32 %v543, %v1923
      %v1925 = vpop.f32.mrf.mxu0
      %v1926 = vadd.f32 %v543, %v1925
      %1927 = vmatmul.bf16.gmra.mxu0 %v1400
      %v1928 = vpop.f32.mrf.mxu0
      %v1929 = vadd.f32 %v543, %v1928
      %v1930 = vpop.f32.mrf.mxu0
      %v1931 = vadd.f32 %v543, %v1930
      %1932 = vmatmul.bf16.gmra.mxu0 %v1403
      %v1933 = vpop.f32.mrf.mxu0
      %v1934 = vadd.f32 %v543, %v1933
      %v1935 = vpop.f32.mrf.mxu0
      %v1936 = vadd.f32 %v543, %v1935
      %1937 = vmatmul.bf16.gmra.mxu0 %v1406
      %v1938 = vpop.f32.mrf.mxu0
      %v1939 = vadd.f32 %v543, %v1938
      %v1940 = vpop.f32.mrf.mxu0
      %v1941 = vadd.f32 %v543, %v1940
      %1942 = vmatmul.bf16.gmra.mxu0 %v1409
      %v1943 = vpop.f32.mrf.mxu0
      %v1944 = vadd.f32 %v543, %v1943
      %v1945 = vpop.f32.mrf.mxu0
      %v1946 = vadd.f32 %v543, %v1945
      %1947 = vmatmul.bf16.gmra.mxu0 %v1412
      %v1948 = vpop.f32.mrf.mxu0
      %v1949 = vadd.f32 %v543, %v1948
      %v1950 = vpop.f32.mrf.mxu0
      %v1951 = vadd.f32 %v543, %v1950
      %1952 = vmatmul.bf16.gmra.mxu0 %v1415
      %v1953 = vpop.f32.mrf.mxu0
      %v1954 = vadd.f32 %v543, %v1953
      %v1955 = vpop.f32.mrf.mxu0
      %v1956 = vadd.f32 %v543, %v1955
      %1957 = vmatmul.bf16.gmra.mxu0 %v1418
      %v1958 = vpop.f32.mrf.mxu0
      %v1959 = vadd.f32 %v543, %v1958
      %v1960 = vpop.f32.mrf.mxu0
      %v1961 = vadd.f32 %v543, %v1960
      %1962 = vmatmul.bf16.gmra.mxu0 %v1421
      %v1963 = vpop.f32.mrf.mxu0
      %v1964 = vadd.f32 %v543, %v1963
      %v1965 = vpop.f32.mrf.mxu0
      %v1966 = vadd.f32 %v543, %v1965
      %1967 = vmatmul.bf16.gmra.mxu0 %v1424
      %v1968 = vpop.f32.mrf.mxu0
      %v1969 = vadd.f32 %v543, %v1968
      %v1970 = vpop.f32.mrf.mxu0
      %v1971 = vadd.f32 %v543, %v1970
      %1972 = vmatmul.bf16.gmra.mxu0 %v1427
      %v1973 = vpop.f32.mrf.mxu0
      %v1974 = vadd.f32 %v543, %v1973
      %v1975 = vpop.f32.mrf.mxu0
      %v1976 = vadd.f32 %v543, %v1975
      %1977 = vmatmul.bf16.gmra.mxu0 %v1430
      %v1978 = vpop.f32.mrf.mxu0
      %v1979 = vadd.f32 %v543, %v1978
      %v1980 = vpop.f32.mrf.mxu0
      %v1981 = vadd.f32 %v543, %v1980
      %1982 = vmatmul.bf16.gmra.mxu0 %v1433
      %v1983 = vpop.f32.mrf.mxu0
      %v1984 = vadd.f32 %v543, %v1983
      %v1985 = vpop.f32.mrf.mxu0
      %v1986 = vadd.f32 %v543, %v1985
      %1987 = vmatmul.bf16.gmra.mxu0 %v1436
      %v1988 = vpop.f32.mrf.mxu0
      %v1989 = vadd.f32 %v543, %v1988
      %v1990 = vpop.f32.mrf.mxu0
      %v1991 = vadd.f32 %v543, %v1990
      %1992 = vmatmul.bf16.gmra.mxu0 %v1439
      %v1993 = vpop.f32.mrf.mxu0
      %v1994 = vadd.f32 %v543, %v1993
      %v1995 = vpop.f32.mrf.mxu0
      %v1996 = vadd.f32 %v543, %v1995
      %1997 = vmatmul.bf16.gmra.mxu0 %v1442
      %v1998 = vpop.f32.mrf.mxu0
      %v1999 = vadd.f32 %v543, %v1998
      %v2000 = vpop.f32.mrf.mxu0
      %v2001 = vadd.f32 %v543, %v2000
      %2002 = vmatmul.bf16.gmra.mxu0 %v1445
      %v2003 = vpop.f32.mrf.mxu0
      %v2004 = vadd.f32 %v543, %v2003
      %v2005 = vpop.f32.mrf.mxu0
      %v2006 = vadd.f32 %v543, %v2005
      %2007 = vmatmul.bf16.gmra.mxu0 %v1448
      %v2008 = vpop.f32.mrf.mxu0
      %v2009 = vadd.f32 %v543, %v2008
      %v2010 = vpop.f32.mrf.mxu0
      %v2011 = vadd.f32 %v543, %v2010
      %2012 = vmatmul.bf16.gmra.mxu0 %v1451
      %v2013 = vpop.f32.mrf.mxu0
      %v2014 = vadd.f32 %v543, %v2013
      %v2015 = vpop.f32.mrf.mxu0
      %v2016 = vadd.f32 %v543, %v2015
      %2017 = vmatmul.bf16.gmra.mxu0 %v1454
      %v2018 = vpop.f32.mrf.mxu0
      %v2019 = vadd.f32 %v543, %v2018
      %v2020 = vpop.f32.mrf.mxu0
      %v2021 = vadd.f32 %v543, %v2020
      %2022 = vmatmul.bf16.gmra.mxu0 %v1457
      %v2023 = vpop.f32.mrf.mxu0
      %v2024 = vadd.f32 %v543, %v2023
      %v2025 = vpop.f32.mrf.mxu0
      %v2026 = vadd.f32 %v543, %v2025
      %2027 = vmatmul.bf16.gmra.mxu0 %v1460
      %v2028 = vpop.f32.mrf.mxu0
      %v2029 = vadd.f32 %v543, %v2028
      %v2030 = vpop.f32.mrf.mxu0
      %v2031 = vadd.f32 %v543, %v2030
      %2032 = vmatmul.bf16.gmra.mxu0 %v1463
      %v2033 = vpop.f32.mrf.mxu0
      %v2034 = vadd.f32 %v543, %v2033
      %v2035 = vpop.f32.mrf.mxu0
      %v2036 = vadd.f32 %v543, %v2035
      %2037 = vmatmul.bf16.gmra.mxu0 %v1466
      %v2038 = vpop.f32.mrf.mxu0
      %v2039 = vadd.f32 %v543, %v2038
      %v2040 = vpop.f32.mrf.mxu0
      %v2041 = vadd.f32 %v543, %v2040
      %2042 = vmatmul.bf16.gmra.mxu0 %v1469
      %v2043 = vpop.f32.mrf.mxu0
      %v2044 = vadd.f32 %v543, %v2043
      %v2045 = vpop.f32.mrf.mxu0
      %v2046 = vadd.f32 %v543, %v2045
      %2047 = vmatmul.bf16.gmra.mxu0 %v1472
      %v2048 = vpop.f32.mrf.mxu0
      %v2049 = vadd.f32 %v543, %v2048
      %v2050 = vpop.f32.mrf.mxu0
      %v2051 = vadd.f32 %v543, %v2050
      %2052 = vmatmul.bf16.gmra.mxu0 %v1475
      %v2053 = vpop.f32.mrf.mxu0
      %v2054 = vadd.f32 %v543, %v2053
      %v2055 = vpop.f32.mrf.mxu0
      %v2056 = vadd.f32 %v543, %v2055
      %2057 = vmatmul.bf16.gmra.mxu0 %v1478
      %v2058 = vpop.f32.mrf.mxu0
      %v2059 = vadd.f32 %v543, %v2058
      %v2060 = vpop.f32.mrf.mxu0
      %v2061 = vadd.f32 %v543, %v2060
      %2062 = vmatmul.bf16.gmra.mxu0 %v1481
      %v2063 = vpop.f32.mrf.mxu0
      %v2064 = vadd.f32 %v543, %v2063
      %v2065 = vpop.f32.mrf.mxu0
      %v2066 = vadd.f32 %v543, %v2065
      %2067 = vmatmul.bf16.gmra.mxu0 %v1484
      %v2068 = vpop.f32.mrf.mxu0
      %v2069 = vadd.f32 %v543, %v2068
      %v2070 = vpop.f32.mrf.mxu0
      %v2071 = vadd.f32 %v543, %v2070
      %2072 = vmatmul.bf16.gmra.mxu0 %v1487
      %v2073 = vpop.f32.mrf.mxu0
      %v2074 = vadd.f32 %v543, %v2073
      %v2075 = vpop.f32.mrf.mxu0
      %v2076 = vadd.f32 %v543, %v2075
      %2077 = vmatmul.bf16.gmra.mxu0 %v1490
      %v2078 = vpop.f32.mrf.mxu0
      %v2079 = vadd.f32 %v543, %v2078
      %v2080 = vpop.f32.mrf.mxu0
      %v2081 = vadd.f32 %v543, %v2080
      %2082 = vmatmul.bf16.gmra.mxu0 %v1493
      %v2083 = vpop.f32.mrf.mxu0
      %v2084 = vadd.f32 %v543, %v2083
      %v2085 = vpop.f32.mrf.mxu0
      %v2086 = vadd.f32 %v543, %v2085
      %2087 = vmatmul.bf16.gmra.mxu0 %v1496
      %v2088 = vpop.f32.mrf.mxu0
      %v2089 = vadd.f32 %v543, %v2088
      %v2090 = vpop.f32.mrf.mxu0
      %v2091 = vadd.f32 %v543, %v2090
      %2092 = vmatmul.bf16.gmra.mxu0 %v1499
      %v2093 = vpop.f32.mrf.mxu0
      %v2094 = vadd.f32 %v543, %v2093
      %v2095 = vpop.f32.mrf.mxu0
      %v2096 = vadd.f32 %v543, %v2095
      %2097 = vmatmul.bf16.gmra.mxu0 %v1502
      %v2098 = vpop.f32.mrf.mxu0
      %v2099 = vadd.f32 %v543, %v2098
      %v2100 = vpop.f32.mrf.mxu0
      %v2101 = vadd.f32 %v543, %v2100
      %2102 = vmatmul.bf16.gmra.mxu0 %v1505
      %v2103 = vpop.f32.mrf.mxu0
      %v2104 = vadd.f32 %v543, %v2103
      %v2105 = vpop.f32.mrf.mxu0
      %v2106 = vadd.f32 %v543, %v2105
      %2107 = vmatmul.bf16.gmra.mxu0 %v1508
      %v2108 = vpop.f32.mrf.mxu0
      %v2109 = vadd.f32 %v543, %v2108
      %v2110 = vpop.f32.mrf.mxu0
      %v2111 = vadd.f32 %v543, %v2110
      %2112 = vmatmul.bf16.gmra.mxu0 %v1511
      %v2113 = vpop.f32.mrf.mxu0
      %v2114 = vadd.f32 %v543, %v2113
      %v2115 = vpop.f32.mrf.mxu0
      %v2116 = vadd.f32 %v543, %v2115
      %2117 = vmatmul.bf16.gmra.mxu0 %v1514
      %v2118 = vpop.f32.mrf.mxu0
      %v2119 = vadd.f32 %v543, %v2118
      %v2120 = vpop.f32.mrf.mxu0
      %v2121 = vadd.f32 %v543, %v2120
      %2122 = vmatmul.bf16.gmra.mxu0 %v1517
      %v2123 = vpop.f32.mrf.mxu0
      %v2124 = vadd.f32 %v543, %v2123
      %v2125 = vpop.f32.mrf.mxu0
      %v2126 = vadd.f32 %v543, %v2125
      %2127 = vmatmul.bf16.gmra.mxu0 %v1520
      %v2128 = vpop.f32.mrf.mxu0
      %v2129 = vadd.f32 %v543, %v2128
      %v2130 = vpop.f32.mrf.mxu0
      %v2131 = vadd.f32 %v543, %v2130
      %2132 = vmatmul.bf16.gmra.mxu0 %v1523
      %v2133 = vpop.f32.mrf.mxu0
      %v2134 = vadd.f32 %v543, %v2133
      %v2135 = vpop.f32.mrf.mxu0
      %v2136 = vadd.f32 %v543, %v2135
      %2137 = vmatmul.bf16.gmra.mxu0 %v1526
      %v2138 = vpop.f32.mrf.mxu0
      %v2139 = vadd.f32 %v543, %v2138
      %v2140 = vpop.f32.mrf.mxu0
      %v2141 = vadd.f32 %v543, %v2140
      %2142 = vmatmul.bf16.gmra.mxu0 %v1529
      %v2143 = vpop.f32.mrf.mxu0
      %v2144 = vadd.f32 %v543, %v2143
      %v2145 = vpop.f32.mrf.mxu0
      %v2146 = vadd.f32 %v543, %v2145
      %2147 = vmatmul.bf16.gmra.mxu0 %v1532
      %v2148 = vpop.f32.mrf.mxu0
      %v2149 = vadd.f32 %v543, %v2148
      %v2150 = vpop.f32.mrf.mxu0
      %v2151 = vadd.f32 %v543, %v2150
      %2152 = vmatmul.bf16.gmra.mxu0 %v1535
      %v2153 = vpop.f32.mrf.mxu0
      %v2154 = vadd.f32 %v543, %v2153
      %v2155 = vpop.f32.mrf.mxu0
      %v2156 = vadd.f32 %v543, %v2155
      %2157 = vmatmul.bf16.gmra.mxu0 %v1538
      %v2158 = vpop.f32.mrf.mxu0
      %v2159 = vadd.f32 %v543, %v2158
      %v2160 = vpop.f32.mrf.mxu0
      %v2161 = vadd.f32 %v543, %v2160
      %2162 = vmatmul.bf16.gmra.mxu0 %v1541
      %v2163 = vpop.f32.mrf.mxu0
      %v2164 = vadd.f32 %v543, %v2163
      %v2165 = vpop.f32.mrf.mxu0
      %v2166 = vadd.f32 %v543, %v2165
      %2167 = vmatmul.bf16.gmra.mxu0 %v1544
      %v2168 = vpop.f32.mrf.mxu0
      %v2169 = vadd.f32 %v543, %v2168
      %v2170 = vpop.f32.mrf.mxu0
      %v2171 = vadd.f32 %v543, %v2170
      %2172 = vmatmul.bf16.gmra.mxu0 %v1547
      %v2173 = vpop.f32.mrf.mxu0
      %v2174 = vadd.f32 %v543, %v2173
      %v2175 = vpop.f32.mrf.mxu0
      %v2176 = vadd.f32 %v543, %v2175
      %2177 = vmatmul.bf16.gmra.mxu0 %v1550
      %v2178 = vpop.f32.mrf.mxu0
      %v2179 = vadd.f32 %v543, %v2178
      %v2180 = vpop.f32.mrf.mxu0
      %v2181 = vadd.f32 %v543, %v2180
      %2182 = vmatmul.bf16.gmra.mxu0 %v1553
      %v2183 = vpop.f32.mrf.mxu0
      %v2184 = vadd.f32 %v543, %v2183
      %v2185 = vpop.f32.mrf.mxu0
      %v2186 = vadd.f32 %v543, %v2185
      %2187 = vmatmul.bf16.gmra.mxu0 %v1556
      %v2188 = vpop.f32.mrf.mxu0
      %v2189 = vadd.f32 %v543, %v2188
      %v2190 = vpop.f32.mrf.mxu0
      %v2191 = vadd.f32 %v543, %v2190
      %2192 = vmatmul.bf16.gmra.mxu0 %v1559
      %v2193 = vpop.f32.mrf.mxu0
      %v2194 = vadd.f32 %v543, %v2193
      %v2195 = vpop.f32.mrf.mxu0
      %v2196 = vadd.f32 %v543, %v2195
      %2197 = vmatmul.bf16.gmra.mxu0 %v1562
      %v2198 = vpop.f32.mrf.mxu0
      %v2199 = vadd.f32 %v543, %v2198
      %v2200 = vpop.f32.mrf.mxu0
      %v2201 = vadd.f32 %v543, %v2200
      %2202 = vmatmul.bf16.gmra.mxu0 %v1565
      %v2203 = vpop.f32.mrf.mxu0
      %v2204 = vadd.f32 %v543, %v2203
      %v2205 = vpop.f32.mrf.mxu0
      %v2206 = vadd.f32 %v543, %v2205
      %2207 = vmatmul.bf16.gmra.mxu0 %v1568
      %v2208 = vpop.f32.mrf.mxu0
      %v2209 = vadd.f32 %v543, %v2208
      %v2210 = vpop.f32.mrf.mxu0
      %v2211 = vadd.f32 %v543, %v2210
      %2212 = vmatmul.bf16.gmra.mxu0 %v1571
      %v2213 = vpop.f32.mrf.mxu0
      %v2214 = vadd.f32 %v543, %v2213
      %v2215 = vpop.f32.mrf.mxu0
      %v2216 = vadd.f32 %v543, %v2215
      %2217 = vmatmul.bf16.gmra.mxu0 %v1574
      %v2218 = vpop.f32.mrf.mxu0
      %v2219 = vadd.f32 %v543, %v2218
      %v2220 = vpop.f32.mrf.mxu0
      %v2221 = vadd.f32 %v543, %v2220
      %2222 = vmatmul.bf16.gmra.mxu0 %v1577
      %v2223 = vpop.f32.mrf.mxu0
      %v2224 = vadd.f32 %v543, %v2223
      %v2225 = vpop.f32.mrf.mxu0
      %v2226 = vadd.f32 %v543, %v2225
      %2227 = vmatmul.bf16.gmra.mxu0 %v1580
      %v2228 = vpop.f32.mrf.mxu0
      %v2229 = vadd.f32 %v543, %v2228
      %v2230 = vpop.f32.mrf.mxu0
      %v2231 = vadd.f32 %v543, %v2230
      %2232 = vmatmul.bf16.gmra.mxu0 %v1583
      %v2233 = vpop.f32.mrf.mxu0
      %v2234 = vadd.f32 %v543, %v2233
      %v2235 = vpop.f32.mrf.mxu0
      %v2236 = vadd.f32 %v543, %v2235
      %2237 = vdwg.mxu0
      %v2238 = vmax.f32 %v1599, 0.0
      %v2239 = vmax.f32 %v1601, 0.0
      %v2240 = vmax.f32 %v1604, 0.0
      %v2241 = vmax.f32 %v1606, 0.0
      %v2242 = vmax.f32 %v1609, 0.0
      %v2243 = vmax.f32 %v1611, 0.0
      %v2244 = vmax.f32 %v1614, 0.0
      %v2245 = vmax.f32 %v1616, 0.0
      %v2246 = vmax.f32 %v1619, 0.0
      %v2247 = vmax.f32 %v1621, 0.0
      %v2248 = vmax.f32 %v1624, 0.0
      %v2249 = vmax.f32 %v1626, 0.0
      %v2250 = vmax.f32 %v1629, 0.0
      %v2251 = vmax.f32 %v1631, 0.0
      %v2252 = vmax.f32 %v1634, 0.0
      %v2253 = vmax.f32 %v1636, 0.0
      %v2254 = vmax.f32 %v1639, 0.0
      %v2255 = vmax.f32 %v1641, 0.0
      %v2256 = vmax.f32 %v1644, 0.0
      %v2257 = vmax.f32 %v1646, 0.0
      %v2258 = vmax.f32 %v1649, 0.0
      %v2259 = vmax.f32 %v1651, 0.0
      %v2260 = vmax.f32 %v1654, 0.0
      %v2261 = vmax.f32 %v1656, 0.0
      %v2262 = vmax.f32 %v1659, 0.0
      %v2263 = vmax.f32 %v1661, 0.0
      %v2264 = vmax.f32 %v1664, 0.0
      %v2265 = vmax.f32 %v1666, 0.0
      %v2266 = vmax.f32 %v1669, 0.0
      %v2267 = vmax.f32 %v1671, 0.0
      %v2268 = vmax.f32 %v1674, 0.0
      %v2269 = vmax.f32 %v1676, 0.0
      %v2270 = vmax.f32 %v1679, 0.0
      %v2271 = vmax.f32 %v1681, 0.0
      %v2272 = vmax.f32 %v1684, 0.0
      %v2273 = vmax.f32 %v1686, 0.0
      %v2274 = vmax.f32 %v1689, 0.0
      %v2275 = vmax.f32 %v1691, 0.0
      %v2276 = vmax.f32 %v1694, 0.0
      %v2277 = vmax.f32 %v1696, 0.0
      %v2278 = vmax.f32 %v1699, 0.0
      %v2279 = vmax.f32 %v1701, 0.0
      %v2280 = vmax.f32 %v1704, 0.0
      %v2281 = vmax.f32 %v1706, 0.0
      %v2282 = vmax.f32 %v1709, 0.0
      %v2283 = vmax.f32 %v1711, 0.0
      %v2284 = vmax.f32 %v1714, 0.0
      %v2285 = vmax.f32 %v1716, 0.0
      %v2286 = vmax.f32 %v1719, 0.0
      %v2287 = vmax.f32 %v1721, 0.0
      %v2288 = vmax.f32 %v1724, 0.0
      %v2289 = vmax.f32 %v1726, 0.0
      %v2290 = vmax.f32 %v1729, 0.0
      %v2291 = vmax.f32 %v1731, 0.0
      %v2292 = vmax.f32 %v1734, 0.0
      %v2293 = vmax.f32 %v1736, 0.0
      %v2294 = vmax.f32 %v1739, 0.0
      %v2295 = vmax.f32 %v1741, 0.0
      %v2296 = vmax.f32 %v1744, 0.0
      %v2297 = vmax.f32 %v1746, 0.0
      %v2298 = vmax.f32 %v1749, 0.0
      %v2299 = vmax.f32 %v1751, 0.0
      %v2300 = vmax.f32 %v1754, 0.0
      %v2301 = vmax.f32 %v1756, 0.0
      %v2302 = vmax.f32 %v1759, 0.0
      %v2303 = vmax.f32 %v1761, 0.0
      %v2304 = vmax.f32 %v1764, 0.0
      %v2305 = vmax.f32 %v1766, 0.0
      %v2306 = vmax.f32 %v1769, 0.0
      %v2307 = vmax.f32 %v1771, 0.0
      %v2308 = vmax.f32 %v1774, 0.0
      %v2309 = vmax.f32 %v1776, 0.0
      %v2310 = vmax.f32 %v1779, 0.0
      %v2311 = vmax.f32 %v1781, 0.0
      %v2312 = vmax.f32 %v1784, 0.0
      %v2313 = vmax.f32 %v1786, 0.0
      %v2314 = vmax.f32 %v1789, 0.0
      %v2315 = vmax.f32 %v1791, 0.0
      %v2316 = vmax.f32 %v1794, 0.0
      %v2317 = vmax.f32 %v1796, 0.0
      %v2318 = vmax.f32 %v1799, 0.0
      %v2319 = vmax.f32 %v1801, 0.0
      %v2320 = vmax.f32 %v1804, 0.0
      %v2321 = vmax.f32 %v1806, 0.0
      %v2322 = vmax.f32 %v1809, 0.0
      %v2323 = vmax.f32 %v1811, 0.0
      %v2324 = vmax.f32 %v1814, 0.0
      %v2325 = vmax.f32 %v1816, 0.0
      %v2326 = vmax.f32 %v1819, 0.0
      %v2327 = vmax.f32 %v1821, 0.0
      %v2328 = vmax.f32 %v1824, 0.0
      %v2329 = vmax.f32 %v1826, 0.0
      %v2330 = vmax.f32 %v1829, 0.0
      %v2331 = vmax.f32 %v1831, 0.0
      %v2332 = vmax.f32 %v1834, 0.0
      %v2333 = vmax.f32 %v1836, 0.0
      %v2334 = vmax.f32 %v1839, 0.0
      %v2335 = vmax.f32 %v1841, 0.0
      %v2336 = vmax.f32 %v1844, 0.0
      %v2337 = vmax.f32 %v1846, 0.0
      %v2338 = vmax.f32 %v1849, 0.0
      %v2339 = vmax.f32 %v1851, 0.0
      %v2340 = vmax.f32 %v1854, 0.0
      %v2341 = vmax.f32 %v1856, 0.0
      %v2342 = vmax.f32 %v1859, 0.0
      %v2343 = vmax.f32 %v1861, 0.0
      %v2344 = vmax.f32 %v1864, 0.0
      %v2345 = vmax.f32 %v1866, 0.0
      %v2346 = vmax.f32 %v1869, 0.0
      %v2347 = vmax.f32 %v1871, 0.0
      %v2348 = vmax.f32 %v1874, 0.0
      %v2349 = vmax.f32 %v1876, 0.0
      %v2350 = vmax.f32 %v1879, 0.0
      %v2351 = vmax.f32 %v1881, 0.0
      %v2352 = vmax.f32 %v1884, 0.0
      %v2353 = vmax.f32 %v1886, 0.0
      %v2354 = vmax.f32 %v1889, 0.0
      %v2355 = vmax.f32 %v1891, 0.0
      %v2356 = vmax.f32 %v1894, 0.0
      %v2357 = vmax.f32 %v1896, 0.0
      %v2358 = vmax.f32 %v1899, 0.0
      %v2359 = vmax.f32 %v1901, 0.0
      %v2360 = vmax.f32 %v1904, 0.0
      %v2361 = vmax.f32 %v1906, 0.0
      %v2362 = vmax.f32 %v1909, 0.0
      %v2363 = vmax.f32 %v1911, 0.0
      %v2364 = vmax.f32 %v1914, 0.0
      %v2365 = vmax.f32 %v1916, 0.0
      %v2366 = vmax.f32 %v1919, 0.0
      %v2367 = vmax.f32 %v1921, 0.0
      %v2368 = vmax.f32 %v1924, 0.0
      %v2369 = vmax.f32 %v1926, 0.0
      %v2370 = vmax.f32 %v1929, 0.0
      %v2371 = vmax.f32 %v1931, 0.0
      %v2372 = vmax.f32 %v1934, 0.0
      %v2373 = vmax.f32 %v1936, 0.0
      %v2374 = vmax.f32 %v1939, 0.0
      %v2375 = vmax.f32 %v1941, 0.0
      %v2376 = vmax.f32 %v1944, 0.0
      %v2377 = vmax.f32 %v1946, 0.0
      %v2378 = vmax.f32 %v1949, 0.0
      %v2379 = vmax.f32 %v1951, 0.0
      %v2380 = vmax.f32 %v1954, 0.0
      %v2381 = vmax.f32 %v1956, 0.0
      %v2382 = vmax.f32 %v1959, 0.0
      %v2383 = vmax.f32 %v1961, 0.0
      %v2384 = vmax.f32 %v1964, 0.0
      %v2385 = vmax.f32 %v1966, 0.0
      %v2386 = vmax.f32 %v1969, 0.0
      %v2387 = vmax.f32 %v1971, 0.0
      %v2388 = vmax.f32 %v1974, 0.0
      %v2389 = vmax.f32 %v1976, 0.0
      %v2390 = vmax.f32 %v1979, 0.0
      %v2391 = vmax.f32 %v1981, 0.0
      %v2392 = vmax.f32 %v1984, 0.0
      %v2393 = vmax.f32 %v1986, 0.0
      %v2394 = vmax.f32 %v1989, 0.0
      %v2395 = vmax.f32 %v1991, 0.0
      %v2396 = vmax.f32 %v1994, 0.0
      %v2397 = vmax.f32 %v1996, 0.0
      %v2398 = vmax.f32 %v1999, 0.0
      %v2399 = vmax.f32 %v2001, 0.0
      %v2400 = vmax.f32 %v2004, 0.0
      %v2401 = vmax.f32 %v2006, 0.0
      %v2402 = vmax.f32 %v2009, 0.0
      %v2403 = vmax.f32 %v2011, 0.0
      %v2404 = vmax.f32 %v2014, 0.0
      %v2405 = vmax.f32 %v2016, 0.0
      %v2406 = vmax.f32 %v2019, 0.0
      %v2407 = vmax.f32 %v2021, 0.0
      %v2408 = vmax.f32 %v2024, 0.0
      %v2409 = vmax.f32 %v2026, 0.0
      %v2410 = vmax.f32 %v2029, 0.0
      %v2411 = vmax.f32 %v2031, 0.0
      %v2412 = vmax.f32 %v2034, 0.0
      %v2413 = vmax.f32 %v2036, 0.0
      %v2414 = vmax.f32 %v2039, 0.0
      %v2415 = vmax.f32 %v2041, 0.0
      %v2416 = vmax.f32 %v2044, 0.0
      %v2417 = vmax.f32 %v2046, 0.0
      %v2418 = vmax.f32 %v2049, 0.0
      %v2419 = vmax.f32 %v2051, 0.0
      %v2420 = vmax.f32 %v2054, 0.0
      %v2421 = vmax.f32 %v2056, 0.0
      %v2422 = vmax.f32 %v2059, 0.0
      %v2423 = vmax.f32 %v2061, 0.0
      %v2424 = vmax.f32 %v2064, 0.0
      %v2425 = vmax.f32 %v2066, 0.0
      %v2426 = vmax.f32 %v2069, 0.0
      %v2427 = vmax.f32 %v2071, 0.0
      %v2428 = vmax.f32 %v2074, 0.0
      %v2429 = vmax.f32 %v2076, 0.0
      %v2430 = vmax.f32 %v2079, 0.0
      %v2431 = vmax.f32 %v2081, 0.0
      %v2432 = vmax.f32 %v2084, 0.0
      %v2433 = vmax.f32 %v2086, 0.0
      %v2434 = vmax.f32 %v2089, 0.0
      %v2435 = vmax.f32 %v2091, 0.0
      %v2436 = vmax.f32 %v2094, 0.0
      %v2437 = vmax.f32 %v2096, 0.0
      %v2438 = vmax.f32 %v2099, 0.0
      %v2439 = vmax.f32 %v2101, 0.0
      %v2440 = vmax.f32 %v2104, 0.0
      %v2441 = vmax.f32 %v2106, 0.0
      %v2442 = vmax.f32 %v2109, 0.0
      %v2443 = vmax.f32 %v2111, 0.0
      %v2444 = vmax.f32 %v2114, 0.0
      %v2445 = vmax.f32 %v2116, 0.0
      %v2446 = vmax.f32 %v2119, 0.0
      %v2447 = vmax.f32 %v2121, 0.0
      %v2448 = vmax.f32 %v2124, 0.0
      %v2449 = vmax.f32 %v2126, 0.0
      %v2450 = vmax.f32 %v2129, 0.0
      %v2451 = vmax.f32 %v2131, 0.0
      %v2452 = vmax.f32 %v2134, 0.0
      %v2453 = vmax.f32 %v2136, 0.0
      %v2454 = vmax.f32 %v2139, 0.0
      %v2455 = vmax.f32 %v2141, 0.0
      %v2456 = vmax.f32 %v2144, 0.0
      %v2457 = vmax.f32 %v2146, 0.0
      %v2458 = vmax.f32 %v2149, 0.0
      %v2459 = vmax.f32 %v2151, 0.0
      %v2460 = vmax.f32 %v2154, 0.0
      %v2461 = vmax.f32 %v2156, 0.0
      %v2462 = vmax.f32 %v2159, 0.0
      %v2463 = vmax.f32 %v2161, 0.0
      %v2464 = vmax.f32 %v2164, 0.0
      %v2465 = vmax.f32 %v2166, 0.0
      %v2466 = vmax.f32 %v2169, 0.0
      %v2467 = vmax.f32 %v2171, 0.0
      %v2468 = vmax.f32 %v2174, 0.0
      %v2469 = vmax.f32 %v2176, 0.0
      %v2470 = vmax.f32 %v2179, 0.0
      %v2471 = vmax.f32 %v2181, 0.0
      %v2472 = vmax.f32 %v2184, 0.0
      %v2473 = vmax.f32 %v2186, 0.0
      %v2474 = vmax.f32 %v2189, 0.0
      %v2475 = vmax.f32 %v2191, 0.0
      %v2476 = vmax.f32 %v2194, 0.0
      %v2477 = vmax.f32 %v2196, 0.0
      %v2478 = vmax.f32 %v2199, 0.0
      %v2479 = vmax.f32 %v2201, 0.0
      %v2480 = vmax.f32 %v2204, 0.0
      %v2481 = vmax.f32 %v2206, 0.0
      %v2482 = vmax.f32 %v2209, 0.0
      %v2483 = vmax.f32 %v2211, 0.0
      %v2484 = vmax.f32 %v2214, 0.0
      %v2485 = vmax.f32 %v2216, 0.0
      %v2486 = vmax.f32 %v2219, 0.0
      %v2487 = vmax.f32 %v2221, 0.0
      %v2488 = vmax.f32 %v2224, 0.0
      %v2489 = vmax.f32 %v2226, 0.0
      %v2490 = vmax.f32 %v2229, 0.0
      %v2491 = vmax.f32 %v2231, 0.0
      %v2492 = vmax.f32 %v2234, 0.0
      %v2493 = vmax.f32 %v2236, 0.0
      %v2494 = vadd.f32 %v2238, %v2239
      %v2495 = vadd.f32 %v2494, %v2240
      %v2496 = vadd.f32 %v2495, %v2241
      %v2497 = vadd.f32 %v2496, %v2242
      %v2498 = vadd.f32 %v2497, %v2243
      %v2499 = vadd.f32 %v2498, %v2244
      %v2500 = vadd.f32 %v2499, %v2245
      %v2501 = vadd.f32 %v2500, %v2246
      %v2502 = vadd.f32 %v2501, %v2247
      %v2503 = vadd.f32 %v2502, %v2248
      %v2504 = vadd.f32 %v2503, %v2249
      %v2505 = vadd.f32 %v2504, %v2250
      %v2506 = vadd.f32 %v2505, %v2251
      %v2507 = vadd.f32 %v2506, %v2252
      %v2508 = vadd.f32 %v2507, %v2253
      %v2509 = vadd.f32 %v2508, %v2254
      %v2510 = vadd.f32 %v2509, %v2255
      %v2511 = vadd.f32 %v2510, %v2256
      %v2512 = vadd.f32 %v2511, %v2257
      %v2513 = vadd.f32 %v2512, %v2258
      %v2514 = vadd.f32 %v2513, %v2259
      %v2515 = vadd.f32 %v2514, %v2260
      %v2516 = vadd.f32 %v2515, %v2261
      %v2517 = vadd.f32 %v2516, %v2262
      %v2518 = vadd.f32 %v2517, %v2263
      %v2519 = vadd.f32 %v2518, %v2264
      %v2520 = vadd.f32 %v2519, %v2265
      %v2521 = vadd.f32 %v2520, %v2266
      %v2522 = vadd.f32 %v2521, %v2267
      %v2523 = vadd.f32 %v2522, %v2268
      %v2524 = vadd.f32 %v2523, %v2269
      %v2525 = vrot.slane %v2524, 4
      %v2526 = vadd.f32 %v2524, %v2525
      %v2527 = vrot.slane %v2526, 2
      %v2528 = vadd.f32 %v2526, %v2527
      %v2529 = vrot.slane %v2528, 1
      %v2530 = vadd.f32 %v2528, %v2529
      %v2531 = vadd.f32 %v2270, %v2271
      %v2532 = vadd.f32 %v2531, %v2272
      %v2533 = vadd.f32 %v2532, %v2273
      %v2534 = vadd.f32 %v2533, %v2274
      %v2535 = vadd.f32 %v2534, %v2275
      %v2536 = vadd.f32 %v2535, %v2276
      %v2537 = vadd.f32 %v2536, %v2277
      %v2538 = vadd.f32 %v2537, %v2278
      %v2539 = vadd.f32 %v2538, %v2279
      %v2540 = vadd.f32 %v2539, %v2280
      %v2541 = vadd.f32 %v2540, %v2281
      %v2542 = vadd.f32 %v2541, %v2282
      %v2543 = vadd.f32 %v2542, %v2283
      %v2544 = vadd.f32 %v2543, %v2284
      %v2545 = vadd.f32 %v2544, %v2285
      %v2546 = vadd.f32 %v2545, %v2286
      %v2547 = vadd.f32 %v2546, %v2287
      %v2548 = vadd.f32 %v2547, %v2288
      %v2549 = vadd.f32 %v2548, %v2289
      %v2550 = vadd.f32 %v2549, %v2290
      %v2551 = vadd.f32 %v2550, %v2291
      %v2552 = vadd.f32 %v2551, %v2292
      %v2553 = vadd.f32 %v2552, %v2293
      %v2554 = vadd.f32 %v2553, %v2294
      %v2555 = vadd.f32 %v2554, %v2295
      %v2556 = vadd.f32 %v2555, %v2296
      %v2557 = vadd.f32 %v2556, %v2297
      %v2558 = vadd.f32 %v2557, %v2298
      %v2559 = vadd.f32 %v2558, %v2299
      %v2560 = vadd.f32 %v2559, %v2300
      %v2561 = vadd.f32 %v2560, %v2301
      %v2562 = vrot.slane %v2561, 4
      %v2563 = vadd.f32 %v2561, %v2562
      %v2564 = vrot.slane %v2563, 2
      %v2565 = vadd.f32 %v2563, %v2564
      %v2566 = vrot.slane %v2565, 1
      %v2567 = vadd.f32 %v2565, %v2566
      %v2568 = vadd.f32 %v2302, %v2303
      %v2569 = vadd.f32 %v2568, %v2304
      %v2570 = vadd.f32 %v2569, %v2305
      %v2571 = vadd.f32 %v2570, %v2306
      %v2572 = vadd.f32 %v2571, %v2307
      %v2573 = vadd.f32 %v2572, %v2308
      %v2574 = vadd.f32 %v2573, %v2309
      %v2575 = vadd.f32 %v2574, %v2310
      %v2576 = vadd.f32 %v2575, %v2311
      %v2577 = vadd.f32 %v2576, %v2312
      %v2578 = vadd.f32 %v2577, %v2313
      %v2579 = vadd.f32 %v2578, %v2314
      %v2580 = vadd.f32 %v2579, %v2315
      %v2581 = vadd.f32 %v2580, %v2316
      %v2582 = vadd.f32 %v2581, %v2317
      %v2583 = vadd.f32 %v2582, %v2318
      %v2584 = vadd.f32 %v2583, %v2319
      %v2585 = vadd.f32 %v2584, %v2320
      %v2586 = vadd.f32 %v2585, %v2321
      %v2587 = vadd.f32 %v2586, %v2322
      %v2588 = vadd.f32 %v2587, %v2323
      %v2589 = vadd.f32 %v2588, %v2324
      %v2590 = vadd.f32 %v2589, %v2325
      %v2591 = vadd.f32 %v2590, %v2326
      %v2592 = vadd.f32 %v2591, %v2327
      %v2593 = vadd.f32 %v2592, %v2328
      %v2594 = vadd.f32 %v2593, %v2329
      %v2595 = vadd.f32 %v2594, %v2330
      %v2596 = vadd.f32 %v2595, %v2331
      %v2597 = vadd.f32 %v2596, %v2332
      %v2598 = vadd.f32 %v2597, %v2333
      %v2599 = vrot.slane %v2598, 4
      %v2600 = vadd.f32 %v2598, %v2599
      %v2601 = vrot.slane %v2600, 2
      %v2602 = vadd.f32 %v2600, %v2601
      %v2603 = vrot.slane %v2602, 1
      %v2604 = vadd.f32 %v2602, %v2603
      %v2605 = vadd.f32 %v2334, %v2335
      %v2606 = vadd.f32 %v2605, %v2336
      %v2607 = vadd.f32 %v2606, %v2337
      %v2608 = vadd.f32 %v2607, %v2338
      %v2609 = vadd.f32 %v2608, %v2339
      %v2610 = vadd.f32 %v2609, %v2340
      %v2611 = vadd.f32 %v2610, %v2341
      %v2612 = vadd.f32 %v2611, %v2342
      %v2613 = vadd.f32 %v2612, %v2343
      %v2614 = vadd.f32 %v2613, %v2344
      %v2615 = vadd.f32 %v2614, %v2345
      %v2616 = vadd.f32 %v2615, %v2346
      %v2617 = vadd.f32 %v2616, %v2347
      %v2618 = vadd.f32 %v2617, %v2348
      %v2619 = vadd.f32 %v2618, %v2349
      %v2620 = vadd.f32 %v2619, %v2350
      %v2621 = vadd.f32 %v2620, %v2351
      %v2622 = vadd.f32 %v2621, %v2352
      %v2623 = vadd.f32 %v2622, %v2353
      %v2624 = vadd.f32 %v2623, %v2354
      %v2625 = vadd.f32 %v2624, %v2355
      %v2626 = vadd.f32 %v2625, %v2356
      %v2627 = vadd.f32 %v2626, %v2357
      %v2628 = vadd.f32 %v2627, %v2358
      %v2629 = vadd.f32 %v2628, %v2359
      %v2630 = vadd.f32 %v2629, %v2360
      %v2631 = vadd.f32 %v2630, %v2361
      %v2632 = vadd.f32 %v2631, %v2362
      %v2633 = vadd.f32 %v2632, %v2363
      %v2634 = vadd.f32 %v2633, %v2364
      %v2635 = vadd.f32 %v2634, %v2365
      %v2636 = vrot.slane %v2635, 4
      %v2637 = vadd.f32 %v2635, %v2636
      %v2638 = vrot.slane %v2637, 2
      %v2639 = vadd.f32 %v2637, %v2638
      %v2640 = vrot.slane %v2639, 1
      %v2641 = vadd.f32 %v2639, %v2640
      %v2642 = vadd.f32 %v2366, %v2367
      %v2643 = vadd.f32 %v2642, %v2368
      %v2644 = vadd.f32 %v2643, %v2369
      %v2645 = vadd.f32 %v2644, %v2370
      %v2646 = vadd.f32 %v2645, %v2371
      %v2647 = vadd.f32 %v2646, %v2372
      %v2648 = vadd.f32 %v2647, %v2373
      %v2649 = vadd.f32 %v2648, %v2374
      %v2650 = vadd.f32 %v2649, %v2375
      %v2651 = vadd.f32 %v2650, %v2376
      %v2652 = vadd.f32 %v2651, %v2377
      %v2653 = vadd.f32 %v2652, %v2378
      %v2654 = vadd.f32 %v2653, %v2379
      %v2655 = vadd.f32 %v2654, %v2380
      %v2656 = vadd.f32 %v2655, %v2381
      %v2657 = vadd.f32 %v2656, %v2382
      %v2658 = vadd.f32 %v2657, %v2383
      %v2659 = vadd.f32 %v2658, %v2384
      %v2660 = vadd.f32 %v2659, %v2385
      %v2661 = vadd.f32 %v2660, %v2386
      %v2662 = vadd.f32 %v2661, %v2387
      %v2663 = vadd.f32 %v2662, %v2388
      %v2664 = vadd.f32 %v2663, %v2389
      %v2665 = vadd.f32 %v2664, %v2390
      %v2666 = vadd.f32 %v2665, %v2391
      %v2667 = vadd.f32 %v2666, %v2392
      %v2668 = vadd.f32 %v2667, %v2393
      %v2669 = vadd.f32 %v2668, %v2394
      %v2670 = vadd.f32 %v2669, %v2395
      %v2671 = vadd.f32 %v2670, %v2396
      %v2672 = vadd.f32 %v2671, %v2397
      %v2673 = vrot.slane %v2672, 4
      %v2674 = vadd.f32 %v2672, %v2673
      %v2675 = vrot.slane %v2674, 2
      %v2676 = vadd.f32 %v2674, %v2675
      %v2677 = vrot.slane %v2676, 1
      %v2678 = vadd.f32 %v2676, %v2677
      %v2679 = vadd.f32 %v2398, %v2399
      %v2680 = vadd.f32 %v2679, %v2400
      %v2681 = vadd.f32 %v2680, %v2401
      %v2682 = vadd.f32 %v2681, %v2402
      %v2683 = vadd.f32 %v2682, %v2403
      %v2684 = vadd.f32 %v2683, %v2404
      %v2685 = vadd.f32 %v2684, %v2405
      %v2686 = vadd.f32 %v2685, %v2406
      %v2687 = vadd.f32 %v2686, %v2407
      %v2688 = vadd.f32 %v2687, %v2408
      %v2689 = vadd.f32 %v2688, %v2409
      %v2690 = vadd.f32 %v2689, %v2410
      %v2691 = vadd.f32 %v2690, %v2411
      %v2692 = vadd.f32 %v2691, %v2412
      %v2693 = vadd.f32 %v2692, %v2413
      %v2694 = vadd.f32 %v2693, %v2414
      %v2695 = vadd.f32 %v2694, %v2415
      %v2696 = vadd.f32 %v2695, %v2416
      %v2697 = vadd.f32 %v2696, %v2417
      %v2698 = vadd.f32 %v2697, %v2418
      %v2699 = vadd.f32 %v2698, %v2419
      %v2700 = vadd.f32 %v2699, %v2420
      %v2701 = vadd.f32 %v2700, %v2421
      %v2702 = vadd.f32 %v2701, %v2422
      %v2703 = vadd.f32 %v2702, %v2423
      %v2704 = vadd.f32 %v2703, %v2424
      %v2705 = vadd.f32 %v2704, %v2425
      %v2706 = vadd.f32 %v2705, %v2426
      %v2707 = vadd.f32 %v2706, %v2427
      %v2708 = vadd.f32 %v2707, %v2428
      %v2709 = vadd.f32 %v2708, %v2429
      %v2710 = vrot.slane %v2709, 4
      %v2711 = vadd.f32 %v2709, %v2710
      %v2712 = vrot.slane %v2711, 2
      %v2713 = vadd.f32 %v2711, %v2712
      %v2714 = vrot.slane %v2713, 1
      %v2715 = vadd.f32 %v2713, %v2714
      %v2716 = vadd.f32 %v2430, %v2431
      %v2717 = vadd.f32 %v2716, %v2432
      %v2718 = vadd.f32 %v2717, %v2433
      %v2719 = vadd.f32 %v2718, %v2434
      %v2720 = vadd.f32 %v2719, %v2435
      %v2721 = vadd.f32 %v2720, %v2436
      %v2722 = vadd.f32 %v2721, %v2437
      %v2723 = vadd.f32 %v2722, %v2438
      %v2724 = vadd.f32 %v2723, %v2439
      %v2725 = vadd.f32 %v2724, %v2440
      %v2726 = vadd.f32 %v2725, %v2441
      %v2727 = vadd.f32 %v2726, %v2442
      %v2728 = vadd.f32 %v2727, %v2443
      %v2729 = vadd.f32 %v2728, %v2444
      %v2730 = vadd.f32 %v2729, %v2445
      %v2731 = vadd.f32 %v2730, %v2446
      %v2732 = vadd.f32 %v2731, %v2447
      %v2733 = vadd.f32 %v2732, %v2448
      %v2734 = vadd.f32 %v2733, %v2449
      %v2735 = vadd.f32 %v2734, %v2450
      %v2736 = vadd.f32 %v2735, %v2451
      %v2737 = vadd.f32 %v2736, %v2452
      %v2738 = vadd.f32 %v2737, %v2453
      %v2739 = vadd.f32 %v2738, %v2454
      %v2740 = vadd.f32 %v2739, %v2455
      %v2741 = vadd.f32 %v2740, %v2456
      %v2742 = vadd.f32 %v2741, %v2457
      %v2743 = vadd.f32 %v2742, %v2458
      %v2744 = vadd.f32 %v2743, %v2459
      %v2745 = vadd.f32 %v2744, %v2460
      %v2746 = vadd.f32 %v2745, %v2461
      %v2747 = vrot.slane %v2746, 4
      %v2748 = vadd.f32 %v2746, %v2747
      %v2749 = vrot.slane %v2748, 2
      %v2750 = vadd.f32 %v2748, %v2749
      %v2751 = vrot.slane %v2750, 1
      %v2752 = vadd.f32 %v2750, %v2751
      %v2753 = vadd.f32 %v2462, %v2463
      %v2754 = vadd.f32 %v2753, %v2464
      %v2755 = vadd.f32 %v2754, %v2465
      %v2756 = vadd.f32 %v2755, %v2466
      %v2757 = vadd.f32 %v2756, %v2467
      %v2758 = vadd.f32 %v2757, %v2468
      %v2759 = vadd.f32 %v2758, %v2469
      %v2760 = vadd.f32 %v2759, %v2470
      %v2761 = vadd.f32 %v2760, %v2471
      %v2762 = vadd.f32 %v2761, %v2472
      %v2763 = vadd.f32 %v2762, %v2473
      %v2764 = vadd.f32 %v2763, %v2474
      %v2765 = vadd.f32 %v2764, %v2475
      %v2766 = vadd.f32 %v2765, %v2476
      %v2767 = vadd.f32 %v2766, %v2477
      %v2768 = vadd.f32 %v2767, %v2478
      %v2769 = vadd.f32 %v2768, %v2479
      %v2770 = vadd.f32 %v2769, %v2480
      %v2771 = vadd.f32 %v2770, %v2481
      %v2772 = vadd.f32 %v2771, %v2482
      %v2773 = vadd.f32 %v2772, %v2483
      %v2774 = vadd.f32 %v2773, %v2484
      %v2775 = vadd.f32 %v2774, %v2485
      %v2776 = vadd.f32 %v2775, %v2486
      %v2777 = vadd.f32 %v2776, %v2487
      %v2778 = vadd.f32 %v2777, %v2488
      %v2779 = vadd.f32 %v2778, %v2489
      %v2780 = vadd.f32 %v2779, %v2490
      %v2781 = vadd.f32 %v2780, %v2491
      %v2782 = vadd.f32 %v2781, %v2492
      %v2783 = vadd.f32 %v2782, %v2493
      %v2784 = vrot.slane %v2783, 4
      %v2785 = vadd.f32 %v2783, %v2784
      %v2786 = vrot.slane %v2785, 2
      %v2787 = vadd.f32 %v2785, %v2786
      %v2788 = vrot.slane %v2787, 1
      %v2789 = vadd.f32 %v2787, %v2788
      %v2790 = vmul.f32 %v2530, 0.00390625
      %v2791 = vmul.f32 %v2567, 0.00390625
      %v2792 = vmul.f32 %v2604, 0.00390625
      %v2793 = vmul.f32 %v2641, 0.00390625
      %v2794 = vmul.f32 %v2678, 0.00390625
      %v2795 = vmul.f32 %v2715, 0.00390625
      %v2796 = vmul.f32 %v2752, 0.00390625
      %v2797 = vmul.f32 %v2789, 0.00390625
      %v2798 = vpack.c.bf16 %v2790, %v2790
      %v2799 = vpack.c.bf16 %v2791, %v2791
      %v2800 = vpack.c.bf16 %v2792, %v2792
      %v2801 = vpack.c.bf16 %v2793, %v2793
      %v2802 = vpack.c.bf16 %v2794, %v2794
      %v2803 = vpack.c.bf16 %v2795, %v2795
      %v2804 = vpack.c.bf16 %v2796, %v2796
      %v2805 = vpack.c.bf16 %v2797, %v2797
      %v2806 = vld [vmem:[%s3] sm:$0xf]
      %v2807 = vld [vmem:[%s3 + $0x4] sm:$0xf]
      %v2808 = vld [vmem:[%s3 + $0x8] sm:$0xf]
      %v2809 = vld [vmem:[%s3 + $0xc] sm:$0xf]
      %v2810 = vld [vmem:[%s3 + $0x10] sm:$0xf]
      %v2811 = vld [vmem:[%s3 + $0x14] sm:$0xf]
      %v2812 = vld [vmem:[%s3 + $0x18] sm:$0xf]
      %v2813 = vld [vmem:[%s3 + $0x1c] sm:$0xf]
      %v2814 = vld [vmem:[%s3 + $0x20] sm:$0xf]
      %v2815 = vld [vmem:[%s3 + $0x24] sm:$0xf]
      %v2816 = vld [vmem:[%s3 + $0x28] sm:$0xf]
      %v2817 = vld [vmem:[%s3 + $0x2c] sm:$0xf]
      %v2818 = vld [vmem:[%s3 + $0x30] sm:$0xf]
      %v2819 = vld [vmem:[%s3 + $0x34] sm:$0xf]
      %v2820 = vld [vmem:[%s3 + $0x38] sm:$0xf]
      %v2821 = vld [vmem:[%s3 + $0x3c] sm:$0xf]
      %v2822 = vld [vmem:[%s4] sm:$0x1]
      %v2824 = vperm.slane %v2822, 0
      %v2834 = vunpack.c.l.b16 %v2798
      %v2835 = vunpack.c.l.b16 %v2799
      %v2836 = vunpack.c.l.b16 %v2800
      %v2837 = vunpack.c.l.b16 %v2801
      %v2838 = vunpack.c.l.b16 %v2802
      %v2839 = vunpack.c.l.b16 %v2803
      %v2840 = vunpack.c.l.b16 %v2804
      %v2841 = vunpack.c.l.b16 %v2805
      %vm2842 = vcmask 1041409
      %v2843 = vsel %vm2842, %v2835, %v2834
      %vm2844 = vcmask 1042434
      %v2845 = vsel %vm2844, %v2836, %v2843
      %vm2846 = vcmask 1043459
      %v2847 = vsel %vm2846, %v2837, %v2845
      %vm2848 = vcmask 1044484
      %v2849 = vsel %vm2848, %v2838, %v2847
      %vm2850 = vcmask 1045509
      %v2851 = vsel %vm2850, %v2839, %v2849
      %vm2852 = vcmask 1046534
      %v2853 = vsel %vm2852, %v2840, %v2851
      %vm2854 = vcmask 1047559
      %v2855 = vsel %vm2854, %v2841, %v2853
      %v2856 = vpack.c.b16 %v2855, %v2855
      %v2874 = vunpack.c.l.b16 %v2806
      %v2875 = vunpack.c.l.b16 %v2807
      %v2876 = vunpack.c.l.b16 %v2808
      %v2877 = vunpack.c.l.b16 %v2809
      %v2878 = vunpack.c.l.b16 %v2810
      %v2879 = vunpack.c.l.b16 %v2811
      %v2880 = vunpack.c.l.b16 %v2812
      %v2881 = vunpack.c.l.b16 %v2813
      %v2882 = vunpack.c.l.b16 %v2814
      %v2883 = vunpack.c.l.b16 %v2815
      %v2884 = vunpack.c.l.b16 %v2816
      %v2885 = vunpack.c.l.b16 %v2817
      %v2886 = vunpack.c.l.b16 %v2818
      %v2887 = vunpack.c.l.b16 %v2819
      %v2888 = vunpack.c.l.b16 %v2820
      %v2889 = vunpack.c.l.b16 %v2821
      %v2890 = vpack.c.b16 %v2875, %v2874
      %v2891 = vpack.c.b16 %v2877, %v2876
      %v2892 = vpack.c.b16 %v2879, %v2878
      %v2893 = vpack.c.b16 %v2881, %v2880
      %v2894 = vpack.c.b16 %v2883, %v2882
      %v2895 = vpack.c.b16 %v2885, %v2884
      %v2896 = vpack.c.b16 %v2887, %v2886
      %v2897 = vpack.c.b16 %v2889, %v2888
      %2906 = vmatpush.bf16.msra.mxu0 %v2897
      %2907 = vmatpush.bf16.msra.mxu0 %v2896
      %2908 = vmatpush.bf16.msra.mxu0 %v2895
      %2909 = vmatpush.bf16.msra.mxu0 %v2894
      %2910 = vmatpush.bf16.msra.mxu0 %v2893
      %2911 = vmatpush.bf16.msra.mxu0 %v2892
      %2912 = vmatpush.bf16.msra.mxu0 %v2891
      %2913 = vmatpush.bf16.msra.mxu0 %v2890
      %2914 = vmatmul.bf16.gmra.mxu0 %v2856
      %v2915 = vpop.f32.mrf.mxu0
      %v2916 = vadd.f32 %v2824, %v2915
      %v2917 = vpop.f32.mrf.mxu0
      %2918 = vdwg.mxu0
      %v2919 = vmax.f32 %v2916, 0.0
      %v2920 = vpack.c.bf16 %v2919, %v2919
      %v2921 = vld [vmem:[%s5] sm:$0xf]
      %v2922 = vld [vmem:[%s5 + $0x4] sm:$0xf]
      %v2923 = vld [vmem:[%s5 + $0x8] sm:$0xf]
      %v2924 = vld [vmem:[%s5 + $0xc] sm:$0xf]
      %v2925 = vld [vmem:[%s5 + $0x10] sm:$0xf]
      %v2926 = vld [vmem:[%s5 + $0x14] sm:$0xf]
      %v2927 = vld [vmem:[%s5 + $0x18] sm:$0xf]
      %v2928 = vld [vmem:[%s5 + $0x1c] sm:$0xf]
      %v2929 = vld [vmem:[%s5 + $0x20] sm:$0xf]
      %v2930 = vld [vmem:[%s5 + $0x24] sm:$0xf]
      %v2931 = vld [vmem:[%s5 + $0x28] sm:$0xf]
      %v2932 = vld [vmem:[%s5 + $0x2c] sm:$0xf]
      %v2933 = vld [vmem:[%s5 + $0x30] sm:$0xf]
      %v2934 = vld [vmem:[%s5 + $0x34] sm:$0xf]
      %v2935 = vld [vmem:[%s5 + $0x38] sm:$0xf]
      %v2936 = vld [vmem:[%s5 + $0x3c] sm:$0xf]
      %v2937 = vld [vmem:[%s6] sm:$0x1]
      %v2939 = vperm.slane %v2937, 0
      %v2957 = vunpack.c.l.b16 %v2921
      %v2958 = vunpack.c.l.b16 %v2922
      %v2959 = vunpack.c.l.b16 %v2923
      %v2960 = vunpack.c.l.b16 %v2924
      %v2961 = vunpack.c.l.b16 %v2925
      %v2962 = vunpack.c.l.b16 %v2926
      %v2963 = vunpack.c.l.b16 %v2927
      %v2964 = vunpack.c.l.b16 %v2928
      %v2965 = vunpack.c.l.b16 %v2929
      %v2966 = vunpack.c.l.b16 %v2930
      %v2967 = vunpack.c.l.b16 %v2931
      %v2968 = vunpack.c.l.b16 %v2932
      %v2969 = vunpack.c.l.b16 %v2933
      %v2970 = vunpack.c.l.b16 %v2934
      %v2971 = vunpack.c.l.b16 %v2935
      %v2972 = vunpack.c.l.b16 %v2936
      %v2973 = vpack.c.b16 %v2958, %v2957
      %v2974 = vpack.c.b16 %v2960, %v2959
      %v2975 = vpack.c.b16 %v2962, %v2961
      %v2976 = vpack.c.b16 %v2964, %v2963
      %v2977 = vpack.c.b16 %v2966, %v2965
      %v2978 = vpack.c.b16 %v2968, %v2967
      %v2979 = vpack.c.b16 %v2970, %v2969
      %v2980 = vpack.c.b16 %v2972, %v2971
      %2989 = vmatpush.bf16.msra.mxu0 %v2980
      %2990 = vmatpush.bf16.msra.mxu0 %v2979
      %2991 = vmatpush.bf16.msra.mxu0 %v2978
      %2992 = vmatpush.bf16.msra.mxu0 %v2977
      %2993 = vmatpush.bf16.msra.mxu0 %v2976
      %2994 = vmatpush.bf16.msra.mxu0 %v2975
      %2995 = vmatpush.bf16.msra.mxu0 %v2974
      %2996 = vmatpush.bf16.msra.mxu0 %v2973
      %2997 = vmatmul.bf16.gmra.mxu0 %v2920
      %v2998 = vpop.f32.mrf.mxu0
      %v2999 = vadd.f32 %v2939, %v2998
      %v3000 = vpop.f32.mrf.mxu0
      %3001 = vdwg.mxu0
      %3002 = vst [vmem:[%s278] sm:$0xff] %v2999
      %p3003 = scmp.lt.s32.totalorder %s18, 1
      %s3004 = scalar_select %p3003, %s18, 1
      %s3005 = smul.addr %s3004, 8
      %s3006 = scalar_lea.vmem %s7, %s3005
      // Predicated region
      $region49: #{mapnet_forward.1} parent=47 // pred_check
        %p3007 = pneg %p188
      $region50: #{mapnet_forward.1} parent=47 // pred_check_branch
        %3009 = sbr.rel (%p3007) target = $region52
      $region51: #{mapnet_forward.1} parent=47 // pred_region
        _
      $region52: #{mapnet_forward.1} parent=47 // pred_fallthru
        _
    $region48: #{mapnet_forward.1} parent=5 // pred_fallthru
      _
    %p3010 = scmp.le.s32.totalorder 2, %s13
    // Predicated region
    $region53: #{mapnet_forward.1} parent=5 // pred_check
      %p3011 = pneg %p3010
    $region54: #{mapnet_forward.1} parent=5 // pred_check_branch
      %3013 = sbr.rel (%p3011) target = $region56
    $region55: #{mapnet_forward.1} parent=5 // pred_region
      %s3014 = ssub.s32 %s13, 2
      // Predicated region
      $region57: #{mapnet_forward.1} parent=55 // pred_check
        %p3015 = pneg %p194
      $region58: #{mapnet_forward.1} parent=55 // pred_check_branch
        %3017 = sbr.rel (%p3015) target = $region60
      $region59: #{mapnet_forward.1} parent=55 // pred_region
        %p3018 = scmp.lt.s32.totalorder %s19, 1
        %s3019 = scalar_select %p3018, %s19, 1
        %s3020 = smul.addr %s3019, 8
        %s3021 = scalar_lea.vmem %s7, %s3020
      $region60: #{mapnet_forward.1} parent=55 // pred_fallthru
        _
    $region56: #{mapnet_forward.1} parent=5 // pred_fallthru
      _
  $region6: #{mapnet_forward.1} parent=0 // loop_footer
    %s17 = sadd.s32 1, %s13
  $region7: #{mapnet_forward.1} parent=0 // loop_footer_branch
    %12 = sbr.rel target = $region3
  $region8: #{mapnet_forward.1} parent=0 // loop_exit
    _

</llo_original>
